<compile_context>
chip_gen: v6e
topology: v6e:2x2x1
jax: 0.10.0
libtpu: 0.0.40
codegen_flags: <defaults>
</compile_context>

<pallas_src>
import functools

import jax
import jax.numpy as jnp
import numpy as np
from jax.experimental import pallas as pl
from jax.experimental.pallas import tpu as pltpu


def _round_up(x, m):
    return ((x + m - 1) // m) * m


def _vmem_capacity_bytes():
    try:
        return int(pltpu.get_tpu_info().vmem_capacity_bytes)
    except Exception:
        return 64 * 1024 * 1024   # v7x-conservative fallback (also CPU interpret)


def _pick_chunk(cutn, per_cutout_bytes, fixed_bytes, budget_bytes):
    """Largest divisor of cutn whose per-grid-step live set fits the budget."""
    for d in range(cutn, 0, -1):
        if cutn % d == 0 and fixed_bytes + d * per_cutout_bytes <= budget_bytes:
            return d
    return 1


def _cutouts_kernel(*refs, chunk, p_pad, C, with_noise):
    """One grid step == `chunk` cutouts.

    refs (with_noise=True) : x, wy, wxt, noise, out
    refs (with_noise=False): x, wy, wxt, out

      x     : VMEM (C, Hp, Wp)              bf16  full image (resident block)
      wy    : VMEM (chunk*p_pad, Hp)        bf16  stacked row-interp matrices
      wxt   : VMEM (chunk, Wp, q_pad)       bf16  per-cutout col-interp^T
      noise : VMEM (chunk, C, p_pad, q_pad) f32   facs * gaussian noise
      out   : VMEM (chunk, C, p_pad, q_pad)       module-native layout
    """
    if with_noise:
        x_ref, wy_ref, wxt_ref, noise_ref, o_ref = refs
    else:
        x_ref, wy_ref, wxt_ref, o_ref = refs
        noise_ref = None

    wy = wy_ref[...]                      # hoisted: reused by every channel
    wxt = wxt_ref[...]
    wp = wxt.shape[1]

    for c in range(C):                    # C is small (3); statically unrolled
        # Stage 1: one wide MXU matmul per channel; lanes stay == Wp
        # (128-multiple), K == Hp (128-multiple).  No lane split anywhere.
        s = jnp.dot(wy, x_ref[c], preferred_element_type=jnp.float32)
        # (chunk*p_pad, Wp) -> (chunk, p_pad, Wp): sublane split only,
        # tile-aligned because p_pad % 8 == 0 -> near-free.
        s = s.reshape(chunk, p_pad, wp).astype(jnp.bfloat16)
        # Stage 2: batched over this chunk's cutouts, K == Wp aligned,
        # N == q_pad (128-multiple at CLIP-like cut sizes).
        out_c = jnp.einsum('kpw,kwq->kpq', s, wxt,
                           preferred_element_type=jnp.float32)
        if with_noise:
            out_c = out_c + noise_ref[:, c]
        o_ref[:, c] = out_c.astype(o_ref.dtype)


def make_cutouts_pallas(x_chw, wy2d, wxt_s, noise, *, cutn, chunk, p_pad, q_pad,
                        vmem_limit, out_dtype=jnp.float32):
    C, Hp, Wp = x_chw.shape
    with_noise = noise is not None
    n_steps = cutn // chunk

    kernel = functools.partial(_cutouts_kernel, chunk=chunk, p_pad=p_pad,
                               C=C, with_noise=with_noise)

    # Truthful cost estimate: resident image counted once; no transcendentals.
    out_bytes = cutn * C * p_pad * q_pad * int(np.dtype(out_dtype).itemsize)
    flops = (2 * C * (cutn * p_pad) * Hp * Wp          # stage 1
             + 2 * cutn * C * p_pad * Wp * q_pad)      # stage 2
    bytes_accessed = (x_chw.size * 2                   # resident, counted once
                      + wy2d.size * 2 + wxt_s.size * 2
                      + (noise.size * 4 if with_noise else 0)
                      + out_bytes)

    in_specs = [
        pl.BlockSpec((C, Hp, Wp), lambda i: (0, 0, 0)),                # image (resident)
        pl.BlockSpec((chunk * p_pad, Hp), lambda i: (i, 0)),           # Wy stack
        pl.BlockSpec((chunk, Wp, q_pad), lambda i: (i, 0, 0)),         # Wx^T stack
    ]
    args = [x_chw, wy2d, wxt_s]
    if with_noise:
        in_specs.append(
            pl.BlockSpec((chunk, C, p_pad, q_pad), lambda i: (i, 0, 0, 0)))
        args.append(noise)

    return pl.pallas_call(
        kernel,
        out_shape=jax.ShapeDtypeStruct((cutn, C, p_pad, q_pad), out_dtype),
        grid=(n_steps,),
        in_specs=in_specs,
        out_specs=pl.BlockSpec((chunk, C, p_pad, q_pad), lambda i: (i, 0, 0, 0)),
        compiler_params=pltpu.CompilerParams(
            dimension_semantics=("parallel",),       # sharded on multi-TC chips
            vmem_limit_bytes=int(vmem_limit)),
        cost_estimate=pl.CostEstimate(flops=flops, transcendentals=0,
                                      bytes_accessed=bytes_accessed),
    )(*args)


def _bilinear_matrix(offset, size, full, cut):
    """(cut, full) matrix: rows pick bilinear samples from [offset, offset+size)."""
    t = np.arange(cut, dtype=np.float32)
    if cut > 1:
        src = offset + t * (size - 1.0) / (cut - 1.0)
    else:
        src = np.array([offset + (size - 1.0) / 2.0], dtype=np.float32)
    i0 = np.clip(np.floor(src).astype(np.int32), 0, full - 1)
    i1 = np.clip(i0 + 1, 0, full - 1)
    frac = (src - i0.astype(np.float32)).astype(np.float32)
    m = np.zeros((cut, full), dtype=np.float32)
    rows = np.arange(cut)
    np.add.at(m, (rows, i0), 1.0 - frac)
    np.add.at(m, (rows, i1), frac)
    return m


def _crop_matrices(rng, cut_size, cutn, cut_pow, sideY, sideX):
    """Host-side crop parameters + separable interpolation matrices."""
    max_size = min(sideX, sideY)
    min_size = min(sideX, sideY, cut_size)
    wy_list, wxt_list = [], []
    for _ in range(cutn):
        r = float(rng.random())
        size = int(r ** cut_pow * (max_size - min_size) + min_size)
        offsetx = int(rng.integers(0, sideX - size + 1))
        offsety = int(rng.integers(0, sideY - size + 1))
        wy_list.append(_bilinear_matrix(offsety, size, sideY, cut_size))
        wxt_list.append(_bilinear_matrix(offsetx, size, sideX, cut_size).T)
    wy = np.stack(wy_list, axis=0)        # (cutn, CUT, sideY)
    wxt = np.stack(wxt_list, axis=0)      # (cutn, sideX, CUT)
    return wy, wxt


def make_cutouts_update(x, cut_size, cutn, cut_pow=1.0, noise_fac=0.1, seed=0,
                        out_dtype=jnp.float32):
    """Forward pass of MakeCutoutsUpdate (crop/resample/noise path).

    x : (1, C, sideY, sideX) float32, NCHW like the PyTorch module.
    returns (cutn, C, cut_size, cut_size) float32 (or bf16 via out_dtype if the
    downstream consumer runs bf16 -- halves output HBM writeback).
    """
    assert x.ndim == 4 and x.shape[0] == 1, "module's facs broadcast implies N == 1"
    _, C, sideY, sideX = x.shape

    rng = np.random.default_rng(seed)
    wy_np, wxt_np = _crop_matrices(rng, cut_size, cutn, cut_pow, sideY, sideX)

    # ---- host-side zero padding for layout / MXU alignment (free) ----------
    Hp = _round_up(sideY, 128)        # stage-1 contraction dim, aligned K
    Wp = _round_up(sideX, 128)        # lanes of stage 1 / K of stage 2
    p_pad = _round_up(cut_size, 8)    # sublane-aligned cutout rows
    # lane-dense output stores at CLIP-like sizes; no 16x blow-up at tiny sizes
    q_pad = _round_up(cut_size, 128) if cut_size >= 96 else _round_up(cut_size, 8)

    wy_pad = np.zeros((cutn, p_pad, Hp), np.float32)
    wy_pad[:, :cut_size, :sideY] = wy_np
    wxt_pad = np.zeros((cutn, Wp, q_pad), np.float32)
    wxt_pad[:, :sideX, :cut_size] = wxt_np

    # device operands: bf16 matmul inputs, f32 accumulation in-kernel
    x_chw = jnp.zeros((C, Hp, Wp), jnp.bfloat16).at[:, :sideY, :sideX].set(
        x[0].astype(jnp.bfloat16))
    wy2d = jnp.asarray(wy_pad.reshape(cutn * p_pad, Hp), dtype=jnp.bfloat16)
    wxt_s = jnp.asarray(wxt_pad, dtype=jnp.bfloat16)

    # per-cutout noise: U(0, noise_fac) factor * gaussian, pre-scaled, fused add
    # happens in-kernel.  Skipped entirely (no input, no DMA) when noise_fac==0.
    noise = None
    if noise_fac:
        facs_np = rng.uniform(0.0, noise_fac, size=(cutn, 1, 1, 1)).astype(np.float32)
        kseed = int(rng.integers(0, 2 ** 31 - 1))
        noise = jnp.asarray(facs_np) * jax.random.normal(
            jax.random.PRNGKey(kseed), (cutn, C, p_pad, q_pad), jnp.float32)

    # ---- VMEM-aware cutout tiling ------------------------------------------
    vmem_cap = _vmem_capacity_bytes()
    vmem_limit = min(vmem_cap * 3 // 4, 96 * 1024 * 1024)
    fixed = 2 * C * Hp * Wp * 2                                  # resident image
    per_cut = (2 * p_pad * Hp * 2                                # wy block (x2 buf)
               + 2 * Wp * q_pad * 2                              # wxt block
               + 2 * C * p_pad * q_pad * 4                       # out block
               + (2 * C * p_pad * q_pad * 4 if noise is not None else 0)
               + C * (p_pad * Wp * 6 + p_pad * q_pad * 4))       # intermediates
    chunk = _pick_chunk(cutn, per_cut, fixed, vmem_limit * 2 // 3)
    # NOTE: on small problems chunk == cutn -> a single grid step (no serial
    # split on 1-TC v5e/v6e); only VMEM pressure or megacore sharding tiles it.

    out = make_cutouts_pallas(x_chw, wy2d, wxt_s, noise,
                              cutn=cutn, chunk=chunk, p_pad=p_pad, q_pad=q_pad,
                              vmem_limit=vmem_limit, out_dtype=out_dtype)
    # padding rows/cols are exact zeros produced by zero weights; slice them off
    return out[:, :, :cut_size, :cut_size]


if __name__ == "__main__":
    key = jax.random.PRNGKey(0)
    # small, module-consistent shapes: one RGB image, 24x24 spatial
    x = jax.random.uniform(key, (1, 3, 24, 24), jnp.float32)
    cut_size, cutn = 8, 8

    # correctness smoke test on the deterministic (noise-free) crop/resample path
    out_nf = jax.block_until_ready(
        make_cutouts_update(x, cut_size, cutn, cut_pow=1.0, noise_fac=0.0, seed=0))
    rng = np.random.default_rng(0)
    wy_np, wxt_np = _crop_matrices(rng, cut_size, cutn, 1.0, 24, 24)
    ref = np.einsum('kph,chw,kwq->kcpq', wy_np, np.asarray(x[0], np.float32), wxt_np)
    np.testing.assert_allclose(np.asarray(out_nf), ref, rtol=5e-2, atol=5e-2)

    # real call: per-cutout uniform(0, noise_fac) factor * gaussian noise, fused add
    out = jax.block_until_ready(
        make_cutouts_update(x, cut_size, cutn, cut_pow=1.0, noise_fac=0.1, seed=0))
    assert out.shape == (cutn, 3, cut_size, cut_size) and out.dtype == jnp.float32
    assert bool(jnp.all(jnp.isfinite(out)))
    print("KERNEL_OK")
</pallas_src>

<mosaic_0001>
module attributes {stable_mosaic.version = 11 : i64} {
  func.func @_cutouts_kernel(%arg0: i32, %arg1: memref<3x128x128xbf16, #tpu.memory_space<vmem>>, %arg2: memref<64x128xbf16, #tpu.memory_space<vmem>>, %arg3: memref<8x128x8xbf16, #tpu.memory_space<vmem>>, %arg4: memref<8x3x8x8xf32, #tpu.memory_space<vmem>>) attributes {dimension_semantics = [#tpu.dimension_semantics<parallel>], iteration_bounds = array<i64: 1>, scalar_prefetch = 0 : i64, scratch_operands = 0 : i64, tpu.core_type = #tpu.core_type<tc>, window_params = [{pipeline_mode = #tpu.pipeline_mode<synchronous>, transform_indices = @transform_0, window_bounds = array<i64: 3, 128, 128>}, {transform_indices = @transform_1, window_bounds = array<i64: 64, 128>}, {transform_indices = @transform_2, window_bounds = array<i64: 8, 128, 8>}, {transform_indices = @transform_3, window_bounds = array<i64: 8, 3, 8, 8>}]} {
    %c0 = arith.constant 0 : index
    %c0_0 = arith.constant 0 : index
    %0 = vector.load %arg2[%c0, %c0_0] : memref<64x128xbf16, #tpu.memory_space<vmem>>, vector<64x128xbf16>
    %c0_1 = arith.constant 0 : index
    %c0_2 = arith.constant 0 : index
    %c0_3 = arith.constant 0 : index
    %1 = vector.load %arg3[%c0_1, %c0_2, %c0_3] : memref<8x128x8xbf16, #tpu.memory_space<vmem>>, vector<8x128x8xbf16>
    %c0_4 = arith.constant 0 : index
    %c0_5 = arith.constant 0 : index
    %c0_6 = arith.constant 0 : index
    %2 = vector.load %arg1[%c0_4, %c0_5, %c0_6] : memref<3x128x128xbf16, #tpu.memory_space<vmem>>, vector<1x128x128xbf16>
    %3 = vector.shape_cast %2 : vector<1x128x128xbf16> to vector<128x128xbf16>
    %cst = arith.constant dense<0.000000e+00> : vector<64x128xf32>
    %4 = tpu.matmul %0, %3, %cst {dimension_numbers = #tpu.dot_dimension_numbers<[1], [0], [0], [1], [0, 0, 1, 1], [], []>} : vector<64x128xbf16>, vector<128x128xbf16>, vector<64x128xf32> -> vector<64x128xf32>
    %5 = vector.shape_cast %4 : vector<64x128xf32> to vector<8x8x128xf32>
    %6 = arith.truncf %5 : vector<8x8x128xf32> to vector<8x8x128xbf16>
    "tpu.trace_start"() <{level = 10 : i32, message = "kpw,kwq->kpq"}> : () -> ()
    %cst_7 = arith.constant dense<0.000000e+00> : vector<8x8x8xf32>
    %7 = tpu.matmul %6, %1, %cst_7 {dimension_numbers = #tpu.dot_dimension_numbers<[2], [1], [1], [2], [0, 0, 0, 1, 1, 2], [0], [0]>} : vector<8x8x128xbf16>, vector<8x128x8xbf16>, vector<8x8x8xf32> -> vector<8x8x8xf32>
    "tpu.trace_stop"() : () -> ()
    %c0_8 = arith.constant 0 : index
    %c0_9 = arith.constant 0 : index
    %c0_10 = arith.constant 0 : index
    %c0_11 = arith.constant 0 : index
    %8 = vector.load %arg4[%c0_8, %c0_9, %c0_10, %c0_11] : memref<8x3x8x8xf32, #tpu.memory_space<vmem>>, vector<8x1x8x8xf32>
    %9 = vector.shape_cast %8 : vector<8x1x8x8xf32> to vector<8x8x8xf32>
    %10 = vector.shape_cast %7 : vector<8x8x8xf32> to vector<8x1x8x8xf32>
    tpu.vector_store %arg4[%c0_8, %c0_9, %c0_10, %c0_11], %10 {strides = array<i32>} : memref<8x3x8x8xf32, #tpu.memory_space<vmem>>, vector<8x1x8x8xf32>,
    %c1 = arith.constant 1 : index
    %c0_12 = arith.constant 0 : index
    %c0_13 = arith.constant 0 : index
    %11 = vector.load %arg1[%c1, %c0_12, %c0_13] : memref<3x128x128xbf16, #tpu.memory_space<vmem>>, vector<1x128x128xbf16>
    %12 = vector.shape_cast %11 : vector<1x128x128xbf16> to vector<128x128xbf16>
    %cst_14 = arith.constant dense<0.000000e+00> : vector<64x128xf32>
    %13 = tpu.matmul %0, %12, %cst_14 {dimension_numbers = #tpu.dot_dimension_numbers<[1], [0], [0], [1], [0, 0, 1, 1], [], []>} : vector<64x128xbf16>, vector<128x128xbf16>, vector<64x128xf32> -> vector<64x128xf32>
    %14 = vector.shape_cast %13 : vector<64x128xf32> to vector<8x8x128xf32>
    %15 = arith.truncf %14 : vector<8x8x128xf32> to vector<8x8x128xbf16>
    "tpu.trace_start"() <{level = 10 : i32, message = "kpw,kwq->kpq"}> : () -> ()
    %cst_15 = arith.constant dense<0.000000e+00> : vector<8x8x8xf32>
    %16 = tpu.matmul %15, %1, %cst_15 {dimension_numbers = #tpu.dot_dimension_numbers<[2], [1], [1], [2], [0, 0, 0, 1, 1, 2], [0], [0]>} : vector<8x8x128xbf16>, vector<8x128x8xbf16>, vector<8x8x8xf32> -> vector<8x8x8xf32>
    "tpu.trace_stop"() : () -> ()
    %c0_16 = arith.constant 0 : index
    %c1_17 = arith.constant 1 : index
    %c0_18 = arith.constant 0 : index
    %c0_19 = arith.constant 0 : index
    %17 = vector.load %arg4[%c0_16, %c1_17, %c0_18, %c0_19] : memref<8x3x8x8xf32, #tpu.memory_space<vmem>>, vector<8x1x8x8xf32>
    %18 = vector.shape_cast %17 : vector<8x1x8x8xf32> to vector<8x8x8xf32>
    %19 = vector.shape_cast %16 : vector<8x8x8xf32> to vector<8x1x8x8xf32>
    tpu.vector_store %arg4[%c0_16, %c1_17, %c0_18, %c0_19], %19 {strides = array<i32>} : memref<8x3x8x8xf32, #tpu.memory_space<vmem>>, vector<8x1x8x8xf32>,
    %c2 = arith.constant 2 : index
    %c0_20 = arith.constant 0 : index
    %c0_21 = arith.constant 0 : index
    %20 = vector.load %arg1[%c2, %c0_20, %c0_21] : memref<3x128x128xbf16, #tpu.memory_space<vmem>>, vector<1x128x128xbf16>
    %21 = vector.shape_cast %20 : vector<1x128x128xbf16> to vector<128x128xbf16>
    %cst_22 = arith.constant dense<0.000000e+00> : vector<64x128xf32>
    %22 = tpu.matmul %0, %21, %cst_22 {dimension_numbers = #tpu.dot_dimension_numbers<[1], [0], [0], [1], [0, 0, 1, 1], [], []>} : vector<64x128xbf16>, vector<128x128xbf16>, vector<64x128xf32> -> vector<64x128xf32>
    %23 = vector.shape_cast %22 : vector<64x128xf32> to vector<8x8x128xf32>
    %24 = arith.truncf %23 : vector<8x8x128xf32> to vector<8x8x128xbf16>
    "tpu.trace_start"() <{level = 10 : i32, message = "kpw,kwq->kpq"}> : () -> ()
    %cst_23 = arith.constant dense<0.000000e+00> : vector<8x8x8xf32>
    %25 = tpu.matmul %24, %1, %cst_23 {dimension_numbers = #tpu.dot_dimension_numbers<[2], [1], [1], [2], [0, 0, 0, 1, 1, 2], [0], [0]>} : vector<8x8x128xbf16>, vector<8x128x8xbf16>, vector<8x8x8xf32> -> vector<8x8x8xf32>
    "tpu.trace_stop"() : () -> ()
    %c0_24 = arith.constant 0 : index
    %c2_25 = arith.constant 2 : index
    %c0_26 = arith.constant 0 : index
    %c0_27 = arith.constant 0 : index
    %26 = vector.load %arg4[%c0_24, %c2_25, %c0_26, %c0_27] : memref<8x3x8x8xf32, #tpu.memory_space<vmem>>, vector<8x1x8x8xf32>
    %27 = vector.shape_cast %26 : vector<8x1x8x8xf32> to vector<8x8x8xf32>
    %28 = vector.shape_cast %25 : vector<8x8x8xf32> to vector<8x1x8x8xf32>
    tpu.vector_store %arg4[%c0_24, %c2_25, %c0_26, %c0_27], %28 {strides = array<i32>} : memref<8x3x8x8xf32, #tpu.memory_space<vmem>>, vector<8x1x8x8xf32>,
    return
  }
  func.func @transform_0(%arg0: i32) -> (i32, i32, i32) {
    %c0_i32 = arith.constant 0 : i32
    %c0_i32_0 = arith.constant 0 : i32
    %c0_i32_1 = arith.constant 0 : i32
    %c0_i32_2 = arith.constant 0 : i32
    return %c0_i32, %c0_i32_0, %c0_i32_1 : i32, i32, i32
  }
  func.func @transform_1(%arg0: i32) -> (i32, i32) {
    %c0_i32 = arith.constant 0 : i32
    %c0_i32_0 = arith.constant 0 : i32
    return %arg0, %c0_i32 : i32, i32
  }
  func.func @transform_2(%arg0: i32) -> (i32, i32, i32) {
    %c0_i32 = arith.constant 0 : i32
    %c0_i32_0 = arith.constant 0 : i32
    %c0_i32_1 = arith.constant 0 : i32
    return %arg0, %c0_i32, %c0_i32_0 : i32, i32, i32
  }
  func.func @transform_3(%arg0: i32) -> (i32, i32, i32, i32) {
    %c0_i32 = arith.constant 0 : i32
    %c0_i32_0 = arith.constant 0 : i32
    %c0_i32_1 = arith.constant 0 : i32
    %c0_i32_2 = arith.constant 0 : i32
    return %arg0, %c0_i32, %c0_i32_0, %c0_i32_1 : i32, i32, i32, i32
  }
}

</mosaic_0001>

<llo_original>
// kernel: tpu_custom_call.1
$region0: #{tpu_custom_call.1}
  #allocation0 [shape = 'u32[]', space=smem, size = 0x4, offset = 0x4, fixed_abs, tag = 'smem constant byte address 0x4 - core index']
  #allocation1 [shape = 'u32[144,128]{1,0:T(1,128)}', space=vmem, size = 0x12000, scoped, tag = 'internal scratch']
  %s0 = inlined_call_operand.vmem [shape: bf16[3,128,128], index: 0, kind: input, shape index: {}]
  %s1 = inlined_call_operand.vmem [shape: bf16[64,128], index: 1, kind: input, shape index: {}]
  %s2 = inlined_call_operand.vmem [shape: bf16[8,128,8], index: 2, kind: input, shape index: {}]
  %s3 = inlined_call_operand.hbm [shape: f32[8,3,8,8], index: 3, kind: output, shape index: {}]
  %s4 = sld [smem:[#allocation0]]
  $region22: #{tpu_custom_call.1} parent=0
    _
  %s6 = ssub.s32 1, %s4
  %s7 = scalar_select 0, %s6, %s4
  $region1: #{tpu_custom_call.1} parent=0
    #allocation2 [shape = 'u8[98304]{0}', space=vmem, size = 0x18000, scoped, tag = 'output window, operand 0, single buffered']
    #allocation3 [shape = 's32[1]{0}', space=sflag, size = 0x4, scoped, tag = 'scoped memory for tpu_custom_call.1']
    %8 = vsyncpa [#allocation3], 0
    // Predicated region
    $region2: #{tpu_custom_call.1} parent=1 // pred_check
      _
    $region3: #{tpu_custom_call.1} parent=1 // pred_check_branch
      %10 = sbr.rel (0) target = $region5
    $region4: #{tpu_custom_call.1} parent=1 // pred_region
      _
    $region5: #{tpu_custom_call.1} parent=1 // pred_fallthru
      _
    // Predicated region
    $region6: #{tpu_custom_call.1} parent=1 // pred_check
      _
    $region7: #{tpu_custom_call.1} parent=1 // pred_check_branch
      %12 = sbr.rel (0) target = $region9
    $region8: #{tpu_custom_call.1} parent=1 // pred_region
      _
    $region9: #{tpu_custom_call.1} parent=1 // pred_fallthru
      _
    // Predicated region
    $region10: #{tpu_custom_call.1} parent=1 // pred_check
      _
    $region11: #{tpu_custom_call.1} parent=1 // pred_check_branch
      %14 = sbr.rel (0) target = $region13
    $region12: #{tpu_custom_call.1} parent=1 // pred_region
      _
    $region13: #{tpu_custom_call.1} parent=1 // pred_fallthru
      _
    %v16 = vld [vmem:[%s1] sm:$0xf]
    %v17 = vld [vmem:[%s1 + $0x4] sm:$0xf]
    %v18 = vld [vmem:[%s1 + $0x8] sm:$0xf]
    %v19 = vld [vmem:[%s1 + $0xc] sm:$0xf]
    %v20 = vld [vmem:[%s1 + $0x10] sm:$0xf]
    %v21 = vld [vmem:[%s1 + $0x14] sm:$0xf]
    %v22 = vld [vmem:[%s1 + $0x18] sm:$0xf]
    %v23 = vld [vmem:[%s1 + $0x1c] sm:$0xf]
    %v24 = vld [vmem:[%s2] sm:$0xf]
    %v25 = vld [vmem:[%s2 + $0x4] sm:$0xf]
    %v26 = vld [vmem:[%s2 + $0x8] sm:$0xf]
    %v27 = vld [vmem:[%s2 + $0xc] sm:$0xf]
    %v28 = vld [vmem:[%s2 + $0x10] sm:$0xf]
    %v29 = vld [vmem:[%s2 + $0x14] sm:$0xf]
    %v30 = vld [vmem:[%s2 + $0x18] sm:$0xf]
    %v31 = vld [vmem:[%s2 + $0x1c] sm:$0xf]
    %v32 = vld [vmem:[%s2 + $0x20] sm:$0xf]
    %v33 = vld [vmem:[%s2 + $0x24] sm:$0xf]
    %v34 = vld [vmem:[%s2 + $0x28] sm:$0xf]
    %v35 = vld [vmem:[%s2 + $0x2c] sm:$0xf]
    %v36 = vld [vmem:[%s2 + $0x30] sm:$0xf]
    %v37 = vld [vmem:[%s2 + $0x34] sm:$0xf]
    %v38 = vld [vmem:[%s2 + $0x38] sm:$0xf]
    %v39 = vld [vmem:[%s2 + $0x3c] sm:$0xf]
    %v40 = vld [vmem:[%s2 + $0x40] sm:$0xf]
    %v41 = vld [vmem:[%s2 + $0x44] sm:$0xf]
    %v42 = vld [vmem:[%s2 + $0x48] sm:$0xf]
    %v43 = vld [vmem:[%s2 + $0x4c] sm:$0xf]
    %v44 = vld [vmem:[%s2 + $0x50] sm:$0xf]
    %v45 = vld [vmem:[%s2 + $0x54] sm:$0xf]
    %v46 = vld [vmem:[%s2 + $0x58] sm:$0xf]
    %v47 = vld [vmem:[%s2 + $0x5c] sm:$0xf]
    %v48 = vld [vmem:[%s2 + $0x60] sm:$0xf]
    %v49 = vld [vmem:[%s2 + $0x64] sm:$0xf]
    %v50 = vld [vmem:[%s2 + $0x68] sm:$0xf]
    %v51 = vld [vmem:[%s2 + $0x6c] sm:$0xf]
    %v52 = vld [vmem:[%s2 + $0x70] sm:$0xf]
    %v53 = vld [vmem:[%s2 + $0x74] sm:$0xf]
    %v54 = vld [vmem:[%s2 + $0x78] sm:$0xf]
    %v55 = vld [vmem:[%s2 + $0x7c] sm:$0xf]
    %v56 = vld [vmem:[%s2 + $0x80] sm:$0xf]
    %v57 = vld [vmem:[%s2 + $0x84] sm:$0xf]
    %v58 = vld [vmem:[%s2 + $0x88] sm:$0xf]
    %v59 = vld [vmem:[%s2 + $0x8c] sm:$0xf]
    %v60 = vld [vmem:[%s2 + $0x90] sm:$0xf]
    %v61 = vld [vmem:[%s2 + $0x94] sm:$0xf]
    %v62 = vld [vmem:[%s2 + $0x98] sm:$0xf]
    %v63 = vld [vmem:[%s2 + $0x9c] sm:$0xf]
    %v64 = vld [vmem:[%s2 + $0xa0] sm:$0xf]
    %v65 = vld [vmem:[%s2 + $0xa4] sm:$0xf]
    %v66 = vld [vmem:[%s2 + $0xa8] sm:$0xf]
    %v67 = vld [vmem:[%s2 + $0xac] sm:$0xf]
    %v68 = vld [vmem:[%s2 + $0xb0] sm:$0xf]
    %v69 = vld [vmem:[%s2 + $0xb4] sm:$0xf]
    %v70 = vld [vmem:[%s2 + $0xb8] sm:$0xf]
    %v71 = vld [vmem:[%s2 + $0xbc] sm:$0xf]
    %v72 = vld [vmem:[%s2 + $0xc0] sm:$0xf]
    %v73 = vld [vmem:[%s2 + $0xc4] sm:$0xf]
    %v74 = vld [vmem:[%s2 + $0xc8] sm:$0xf]
    %v75 = vld [vmem:[%s2 + $0xcc] sm:$0xf]
    %v76 = vld [vmem:[%s2 + $0xd0] sm:$0xf]
    %v77 = vld [vmem:[%s2 + $0xd4] sm:$0xf]
    %v78 = vld [vmem:[%s2 + $0xd8] sm:$0xf]
    %v79 = vld [vmem:[%s2 + $0xdc] sm:$0xf]
    %v80 = vld [vmem:[%s2 + $0xe0] sm:$0xf]
    %v81 = vld [vmem:[%s2 + $0xe4] sm:$0xf]
    %v82 = vld [vmem:[%s2 + $0xe8] sm:$0xf]
    %v83 = vld [vmem:[%s2 + $0xec] sm:$0xf]
    %v84 = vld [vmem:[%s2 + $0xf0] sm:$0xf]
    %v85 = vld [vmem:[%s2 + $0xf4] sm:$0xf]
    %v86 = vld [vmem:[%s2 + $0xf8] sm:$0xf]
    %v87 = vld [vmem:[%s2 + $0xfc] sm:$0xf]
    %v88 = vld [vmem:[%s2 + $0x100] sm:$0xf]
    %v89 = vld [vmem:[%s2 + $0x104] sm:$0xf]
    %v90 = vld [vmem:[%s2 + $0x108] sm:$0xf]
    %v91 = vld [vmem:[%s2 + $0x10c] sm:$0xf]
    %v92 = vld [vmem:[%s2 + $0x110] sm:$0xf]
    %v93 = vld [vmem:[%s2 + $0x114] sm:$0xf]
    %v94 = vld [vmem:[%s2 + $0x118] sm:$0xf]
    %v95 = vld [vmem:[%s2 + $0x11c] sm:$0xf]
    %v96 = vld [vmem:[%s2 + $0x120] sm:$0xf]
    %v97 = vld [vmem:[%s2 + $0x124] sm:$0xf]
    %v98 = vld [vmem:[%s2 + $0x128] sm:$0xf]
    %v99 = vld [vmem:[%s2 + $0x12c] sm:$0xf]
    %v100 = vld [vmem:[%s2 + $0x130] sm:$0xf]
    %v101 = vld [vmem:[%s2 + $0x134] sm:$0xf]
    %v102 = vld [vmem:[%s2 + $0x138] sm:$0xf]
    %v103 = vld [vmem:[%s2 + $0x13c] sm:$0xf]
    %v104 = vld [vmem:[%s2 + $0x140] sm:$0xf]
    %v105 = vld [vmem:[%s2 + $0x144] sm:$0xf]
    %v106 = vld [vmem:[%s2 + $0x148] sm:$0xf]
    %v107 = vld [vmem:[%s2 + $0x14c] sm:$0xf]
    %v108 = vld [vmem:[%s2 + $0x150] sm:$0xf]
    %v109 = vld [vmem:[%s2 + $0x154] sm:$0xf]
    %v110 = vld [vmem:[%s2 + $0x158] sm:$0xf]
    %v111 = vld [vmem:[%s2 + $0x15c] sm:$0xf]
    %v112 = vld [vmem:[%s2 + $0x160] sm:$0xf]
    %v113 = vld [vmem:[%s2 + $0x164] sm:$0xf]
    %v114 = vld [vmem:[%s2 + $0x168] sm:$0xf]
    %v115 = vld [vmem:[%s2 + $0x16c] sm:$0xf]
    %v116 = vld [vmem:[%s2 + $0x170] sm:$0xf]
    %v117 = vld [vmem:[%s2 + $0x174] sm:$0xf]
    %v118 = vld [vmem:[%s2 + $0x178] sm:$0xf]
    %v119 = vld [vmem:[%s2 + $0x17c] sm:$0xf]
    %v120 = vld [vmem:[%s2 + $0x180] sm:$0xf]
    %v121 = vld [vmem:[%s2 + $0x184] sm:$0xf]
    %v122 = vld [vmem:[%s2 + $0x188] sm:$0xf]
    %v123 = vld [vmem:[%s2 + $0x18c] sm:$0xf]
    %v124 = vld [vmem:[%s2 + $0x190] sm:$0xf]
    %v125 = vld [vmem:[%s2 + $0x194] sm:$0xf]
    %v126 = vld [vmem:[%s2 + $0x198] sm:$0xf]
    %v127 = vld [vmem:[%s2 + $0x19c] sm:$0xf]
    %v128 = vld [vmem:[%s2 + $0x1a0] sm:$0xf]
    %v129 = vld [vmem:[%s2 + $0x1a4] sm:$0xf]
    %v130 = vld [vmem:[%s2 + $0x1a8] sm:$0xf]
    %v131 = vld [vmem:[%s2 + $0x1ac] sm:$0xf]
    %v132 = vld [vmem:[%s2 + $0x1b0] sm:$0xf]
    %v133 = vld [vmem:[%s2 + $0x1b4] sm:$0xf]
    %v134 = vld [vmem:[%s2 + $0x1b8] sm:$0xf]
    %v135 = vld [vmem:[%s2 + $0x1bc] sm:$0xf]
    %v136 = vld [vmem:[%s2 + $0x1c0] sm:$0xf]
    %v137 = vld [vmem:[%s2 + $0x1c4] sm:$0xf]
    %v138 = vld [vmem:[%s2 + $0x1c8] sm:$0xf]
    %v139 = vld [vmem:[%s2 + $0x1cc] sm:$0xf]
    %v140 = vld [vmem:[%s2 + $0x1d0] sm:$0xf]
    %v141 = vld [vmem:[%s2 + $0x1d4] sm:$0xf]
    %v142 = vld [vmem:[%s2 + $0x1d8] sm:$0xf]
    %v143 = vld [vmem:[%s2 + $0x1dc] sm:$0xf]
    %v144 = vld [vmem:[%s2 + $0x1e0] sm:$0xf]
    %v145 = vld [vmem:[%s2 + $0x1e4] sm:$0xf]
    %v146 = vld [vmem:[%s2 + $0x1e8] sm:$0xf]
    %v147 = vld [vmem:[%s2 + $0x1ec] sm:$0xf]
    %v148 = vld [vmem:[%s2 + $0x1f0] sm:$0xf]
    %v149 = vld [vmem:[%s2 + $0x1f4] sm:$0xf]
    %v150 = vld [vmem:[%s2 + $0x1f8] sm:$0xf]
    %v151 = vld [vmem:[%s2 + $0x1fc] sm:$0xf]
    %v152 = vld [vmem:[%s0] sm:$0xf]
    %v153 = vld [vmem:[%s0 + $0x4] sm:$0xf]
    %v154 = vld [vmem:[%s0 + $0x8] sm:$0xf]
    %v155 = vld [vmem:[%s0 + $0xc] sm:$0xf]
    %v156 = vld [vmem:[%s0 + $0x10] sm:$0xf]
    %v157 = vld [vmem:[%s0 + $0x14] sm:$0xf]
    %v158 = vld [vmem:[%s0 + $0x18] sm:$0xf]
    %v159 = vld [vmem:[%s0 + $0x1c] sm:$0xf]
    %v160 = vld [vmem:[%s0 + $0x20] sm:$0xf]
    %v161 = vld [vmem:[%s0 + $0x24] sm:$0xf]
    %v162 = vld [vmem:[%s0 + $0x28] sm:$0xf]
    %v163 = vld [vmem:[%s0 + $0x2c] sm:$0xf]
    %v164 = vld [vmem:[%s0 + $0x30] sm:$0xf]
    %v165 = vld [vmem:[%s0 + $0x34] sm:$0xf]
    %v166 = vld [vmem:[%s0 + $0x38] sm:$0xf]
    %v167 = vld [vmem:[%s0 + $0x3c] sm:$0xf]
    %v176 = vunpack.c.l.b16 %v16
    %v177 = vunpack.c.l.b16 %v17
    %v178 = vunpack.c.l.b16 %v18
    %v179 = vunpack.c.l.b16 %v19
    %v180 = vunpack.c.l.b16 %v20
    %v181 = vunpack.c.l.b16 %v21
    %v182 = vunpack.c.l.b16 %v22
    %v183 = vunpack.c.l.b16 %v23
    %v184 = vpack.c.b16 %v177, %v176
    %v185 = vpack.c.b16 %v179, %v178
    %v186 = vpack.c.b16 %v181, %v180
    %v187 = vpack.c.b16 %v183, %v182
    %v208 = vunpack.c.l.b16 %v152
    %v209 = vunpack.c.l.b16 %v153
    %v210 = vunpack.c.l.b16 %v154
    %v211 = vunpack.c.l.b16 %v155
    %v212 = vunpack.c.l.b16 %v156
    %v213 = vunpack.c.l.b16 %v157
    %v214 = vunpack.c.l.b16 %v158
    %v215 = vunpack.c.l.b16 %v159
    %v216 = vunpack.c.l.b16 %v160
    %v217 = vunpack.c.l.b16 %v161
    %v218 = vunpack.c.l.b16 %v162
    %v219 = vunpack.c.l.b16 %v163
    %v220 = vunpack.c.l.b16 %v164
    %v221 = vunpack.c.l.b16 %v165
    %v222 = vunpack.c.l.b16 %v166
    %v223 = vunpack.c.l.b16 %v167
    %v224 = vpack.c.b16 %v209, %v208
    %v225 = vpack.c.b16 %v211, %v210
    %v226 = vpack.c.b16 %v213, %v212
    %v227 = vpack.c.b16 %v215, %v214
    %v228 = vpack.c.b16 %v217, %v216
    %v229 = vpack.c.b16 %v219, %v218
    %v230 = vpack.c.b16 %v221, %v220
    %v231 = vpack.c.b16 %v223, %v222
    %240 = vmatprep.subr.bf16.mxu0 0
    %241 = vmatpush1.bf16.msra.mxu0 %v231
    %242 = vmatprep.subr.bf16.mxu0 0
    %243 = vmatpush1.bf16.msra.mxu0 %v230
    %244 = vmatprep.subr.bf16.mxu0 0
    %245 = vmatpush1.bf16.msra.mxu0 %v229
    %246 = vmatprep.subr.bf16.mxu0 0
    %247 = vmatpush1.bf16.msra.mxu0 %v228
    %248 = vmatprep.subr.bf16.mxu0 0
    %249 = vmatpush1.bf16.msra.mxu0 %v227
    %250 = vmatprep.subr.bf16.mxu0 0
    %251 = vmatpush1.bf16.msra.mxu0 %v226
    %252 = vmatprep.subr.bf16.mxu0 0
    %253 = vmatpush1.bf16.msra.mxu0 %v225
    %254 = vmatprep.subr.bf16.mxu0 0
    %255 = vmatpush1.bf16.msra.mxu0 %v224
    %256 = vmatprep.subr.bf16.mxu0 0
    %257 = vmatpush2.bf16.msra.mxu0 0
    %258 = vmatprep.subr.bf16.mxu0 0
    %259 = vmatpush2.bf16.msra.mxu0 0
    %260 = vmatprep.subr.bf16.mxu0 0
    %261 = vmatpush2.bf16.msra.mxu0 0
    %262 = vmatprep.subr.bf16.mxu0 0
    %263 = vmatpush2.bf16.msra.mxu0 0
    %264 = vmatprep.subr.bf16.mxu0 0
    %265 = vmatpush2.bf16.msra.mxu0 0
    %266 = vmatprep.subr.bf16.mxu0 0
    %267 = vmatpush2.bf16.msra.mxu0 0
    %268 = vmatprep.subr.bf16.mxu0 0
    %269 = vmatpush2.bf16.msra.mxu0 0
    %270 = vmatprep.subr.bf16.mxu0 0
    %271 = vmatpush2.bf16.msra.mxu0 0
    %272 = vmatprep.mubr.bf16.mxu0 0
    %273 = vmatmul.mubr.bf16.gmra.mxu0 %v184
    %v274 = vpop.f32.mrf.mxu0
    %v275 = vadd.f32 0.0, %v274
    %v276 = vpop.f32.mrf.mxu0
    %v277 = vpop.f32.mrf.mxu0
    %v278 = vadd.f32 0.0, %v277
    %v279 = vpop.f32.mrf.mxu0
    %280 = vmatprep.mubr.bf16.mxu0 0
    %281 = vmatmul.mubr.bf16.gmra.mxu0 %v185
    %v282 = vpop.f32.mrf.mxu0
    %v283 = vadd.f32 0.0, %v282
    %v284 = vpop.f32.mrf.mxu0
    %v285 = vpop.f32.mrf.mxu0
    %v286 = vadd.f32 0.0, %v285
    %v287 = vpop.f32.mrf.mxu0
    %288 = vmatprep.mubr.bf16.mxu0 0
    %289 = vmatmul.mubr.bf16.gmra.mxu0 %v186
    %v290 = vpop.f32.mrf.mxu0
    %v291 = vadd.f32 0.0, %v290
    %v292 = vpop.f32.mrf.mxu0
    %v293 = vpop.f32.mrf.mxu0
    %v294 = vadd.f32 0.0, %v293
    %v295 = vpop.f32.mrf.mxu0
    %296 = vmatprep.mubr.bf16.mxu0 0
    %297 = vmatmul.mubr.bf16.gmra.mxu0 %v187
    %v298 = vpop.f32.mrf.mxu0
    %v299 = vadd.f32 0.0, %v298
    %v300 = vpop.f32.mrf.mxu0
    %v301 = vpop.f32.mrf.mxu0
    %v302 = vadd.f32 0.0, %v301
    %v303 = vpop.f32.mrf.mxu0
    %304 = vdwg.mxu0
    %v305 = vpack.c.bf16 %v275, %v275
    %v306 = vpack.c.bf16 %v278, %v278
    %v307 = vpack.c.bf16 %v283, %v283
    %v308 = vpack.c.bf16 %v286, %v286
    %v309 = vpack.c.bf16 %v291, %v291
    %v310 = vpack.c.bf16 %v294, %v294
    %v311 = vpack.c.bf16 %v299, %v299
    %v312 = vpack.c.bf16 %v302, %v302
    %v329 = vunpack.c.l.b16 %v24
    %v330 = vunpack.c.l.b16 %v25
    %v331 = vunpack.c.l.b16 %v26
    %v332 = vunpack.c.l.b16 %v27
    %v333 = vunpack.c.l.b16 %v28
    %v334 = vunpack.c.l.b16 %v29
    %v335 = vunpack.c.l.b16 %v30
    %v336 = vunpack.c.l.b16 %v31
    %v337 = vunpack.c.l.b16 %v32
    %v338 = vunpack.c.l.b16 %v33
    %v339 = vunpack.c.l.b16 %v34
    %v340 = vunpack.c.l.b16 %v35
    %v341 = vunpack.c.l.b16 %v36
    %v342 = vunpack.c.l.b16 %v37
    %v343 = vunpack.c.l.b16 %v38
    %v344 = vunpack.c.l.b16 %v39
    %v345 = vpack.c.b16 %v330, %v329
    %v346 = vpack.c.b16 %v332, %v331
    %v347 = vpack.c.b16 %v334, %v333
    %v348 = vpack.c.b16 %v336, %v335
    %v349 = vpack.c.b16 %v338, %v337
    %v350 = vpack.c.b16 %v340, %v339
    %v351 = vpack.c.b16 %v342, %v341
    %v352 = vpack.c.b16 %v344, %v343
    %361 = vmatprep.subr.bf16.mxu0 0
    %362 = vmatpush1.bf16.msra.mxu0 %v352
    %363 = vmatprep.subr.bf16.mxu0 0
    %364 = vmatpush1.bf16.msra.mxu0 %v351
    %365 = vmatprep.subr.bf16.mxu0 0
    %366 = vmatpush1.bf16.msra.mxu0 %v350
    %367 = vmatprep.subr.bf16.mxu0 0
    %368 = vmatpush1.bf16.msra.mxu0 %v349
    %369 = vmatprep.subr.bf16.mxu0 0
    %370 = vmatpush1.bf16.msra.mxu0 %v348
    %371 = vmatprep.subr.bf16.mxu0 0
    %372 = vmatpush1.bf16.msra.mxu0 %v347
    %373 = vmatprep.subr.bf16.mxu0 0
    %374 = vmatpush1.bf16.msra.mxu0 %v346
    %375 = vmatprep.subr.bf16.mxu0 0
    %376 = vmatpush1.bf16.msra.mxu0 %v345
    %377 = vmatprep.subr.bf16.mxu0 0
    %378 = vmatpush2.bf16.msra.mxu0 0
    %379 = vmatprep.subr.bf16.mxu0 0
    %380 = vmatpush2.bf16.msra.mxu0 0
    %381 = vmatprep.subr.bf16.mxu0 0
    %382 = vmatpush2.bf16.msra.mxu0 0
    %383 = vmatprep.subr.bf16.mxu0 0
    %384 = vmatpush2.bf16.msra.mxu0 0
    %385 = vmatprep.subr.bf16.mxu0 0
    %386 = vmatpush2.bf16.msra.mxu0 0
    %387 = vmatprep.subr.bf16.mxu0 0
    %388 = vmatpush2.bf16.msra.mxu0 0
    %389 = vmatprep.subr.bf16.mxu0 0
    %390 = vmatpush2.bf16.msra.mxu0 0
    %391 = vmatprep.subr.bf16.mxu0 0
    %392 = vmatpush2.bf16.msra.mxu0 0
    %393 = vmatprep.mubr.bf16.mxu0 0
    %394 = vmatmul.mubr.bf16.gmra.mxu0 %v305
    %v395 = vpop.f32.mrf.mxu0
    %v396 = vadd.f32 0.0, %v395
    %v397 = vpop.f32.mrf.mxu0
    %v398 = vpop.f32.mrf.mxu0
    %v399 = vpop.f32.mrf.mxu0
    %400 = vdwg.mxu0
    %v417 = vunpack.c.l.b16 %v40
    %v418 = vunpack.c.l.b16 %v41
    %v419 = vunpack.c.l.b16 %v42
    %v420 = vunpack.c.l.b16 %v43
    %v421 = vunpack.c.l.b16 %v44
    %v422 = vunpack.c.l.b16 %v45
    %v423 = vunpack.c.l.b16 %v46
    %v424 = vunpack.c.l.b16 %v47
    %v425 = vunpack.c.l.b16 %v48
    %v426 = vunpack.c.l.b16 %v49
    %v427 = vunpack.c.l.b16 %v50
    %v428 = vunpack.c.l.b16 %v51
    %v429 = vunpack.c.l.b16 %v52
    %v430 = vunpack.c.l.b16 %v53
    %v431 = vunpack.c.l.b16 %v54
    %v432 = vunpack.c.l.b16 %v55
    %v433 = vpack.c.b16 %v418, %v417
    %v434 = vpack.c.b16 %v420, %v419
    %v435 = vpack.c.b16 %v422, %v421
    %v436 = vpack.c.b16 %v424, %v423
    %v437 = vpack.c.b16 %v426, %v425
    %v438 = vpack.c.b16 %v428, %v427
    %v439 = vpack.c.b16 %v430, %v429
    %v440 = vpack.c.b16 %v432, %v431
    %449 = vmatprep.subr.bf16.mxu0 0
    %450 = vmatpush1.bf16.msra.mxu0 %v440
    %451 = vmatprep.subr.bf16.mxu0 0
    %452 = vmatpush1.bf16.msra.mxu0 %v439
    %453 = vmatprep.subr.bf16.mxu0 0
    %454 = vmatpush1.bf16.msra.mxu0 %v438
    %455 = vmatprep.subr.bf16.mxu0 0
    %456 = vmatpush1.bf16.msra.mxu0 %v437
    %457 = vmatprep.subr.bf16.mxu0 0
    %458 = vmatpush1.bf16.msra.mxu0 %v436
    %459 = vmatprep.subr.bf16.mxu0 0
    %460 = vmatpush1.bf16.msra.mxu0 %v435
    %461 = vmatprep.subr.bf16.mxu0 0
    %462 = vmatpush1.bf16.msra.mxu0 %v434
    %463 = vmatprep.subr.bf16.mxu0 0
    %464 = vmatpush1.bf16.msra.mxu0 %v433
    %465 = vmatprep.subr.bf16.mxu0 0
    %466 = vmatpush2.bf16.msra.mxu0 0
    %467 = vmatprep.subr.bf16.mxu0 0
    %468 = vmatpush2.bf16.msra.mxu0 0
    %469 = vmatprep.subr.bf16.mxu0 0
    %470 = vmatpush2.bf16.msra.mxu0 0
    %471 = vmatprep.subr.bf16.mxu0 0
    %472 = vmatpush2.bf16.msra.mxu0 0
    %473 = vmatprep.subr.bf16.mxu0 0
    %474 = vmatpush2.bf16.msra.mxu0 0
    %475 = vmatprep.subr.bf16.mxu0 0
    %476 = vmatpush2.bf16.msra.mxu0 0
    %477 = vmatprep.subr.bf16.mxu0 0
    %478 = vmatpush2.bf16.msra.mxu0 0
    %479 = vmatprep.subr.bf16.mxu0 0
    %480 = vmatpush2.bf16.msra.mxu0 0
    %481 = vmatprep.mubr.bf16.mxu0 0
    %482 = vmatmul.mubr.bf16.gmra.mxu0 %v306
    %v483 = vpop.f32.mrf.mxu0
    %v484 = vadd.f32 0.0, %v483
    %v485 = vpop.f32.mrf.mxu0
    %v486 = vpop.f32.mrf.mxu0
    %v487 = vpop.f32.mrf.mxu0
    %488 = vdwg.mxu0
    %v505 = vunpack.c.l.b16 %v56
    %v506 = vunpack.c.l.b16 %v57
    %v507 = vunpack.c.l.b16 %v58
    %v508 = vunpack.c.l.b16 %v59
    %v509 = vunpack.c.l.b16 %v60
    %v510 = vunpack.c.l.b16 %v61
    %v511 = vunpack.c.l.b16 %v62
    %v512 = vunpack.c.l.b16 %v63
    %v513 = vunpack.c.l.b16 %v64
    %v514 = vunpack.c.l.b16 %v65
    %v515 = vunpack.c.l.b16 %v66
    %v516 = vunpack.c.l.b16 %v67
    %v517 = vunpack.c.l.b16 %v68
    %v518 = vunpack.c.l.b16 %v69
    %v519 = vunpack.c.l.b16 %v70
    %v520 = vunpack.c.l.b16 %v71
    %v521 = vpack.c.b16 %v506, %v505
    %v522 = vpack.c.b16 %v508, %v507
    %v523 = vpack.c.b16 %v510, %v509
    %v524 = vpack.c.b16 %v512, %v511
    %v525 = vpack.c.b16 %v514, %v513
    %v526 = vpack.c.b16 %v516, %v515
    %v527 = vpack.c.b16 %v518, %v517
    %v528 = vpack.c.b16 %v520, %v519
    %537 = vmatprep.subr.bf16.mxu0 0
    %538 = vmatpush1.bf16.msra.mxu0 %v528
    %539 = vmatprep.subr.bf16.mxu0 0
    %540 = vmatpush1.bf16.msra.mxu0 %v527
    %541 = vmatprep.subr.bf16.mxu0 0
    %542 = vmatpush1.bf16.msra.mxu0 %v526
    %543 = vmatprep.subr.bf16.mxu0 0
    %544 = vmatpush1.bf16.msra.mxu0 %v525
    %545 = vmatprep.subr.bf16.mxu0 0
    %546 = vmatpush1.bf16.msra.mxu0 %v524
    %547 = vmatprep.subr.bf16.mxu0 0
    %548 = vmatpush1.bf16.msra.mxu0 %v523
    %549 = vmatprep.subr.bf16.mxu0 0
    %550 = vmatpush1.bf16.msra.mxu0 %v522
    %551 = vmatprep.subr.bf16.mxu0 0
    %552 = vmatpush1.bf16.msra.mxu0 %v521
    %553 = vmatprep.subr.bf16.mxu0 0
    %554 = vmatpush2.bf16.msra.mxu0 0
    %555 = vmatprep.subr.bf16.mxu0 0
    %556 = vmatpush2.bf16.msra.mxu0 0
    %557 = vmatprep.subr.bf16.mxu0 0
    %558 = vmatpush2.bf16.msra.mxu0 0
    %559 = vmatprep.subr.bf16.mxu0 0
    %560 = vmatpush2.bf16.msra.mxu0 0
    %561 = vmatprep.subr.bf16.mxu0 0
    %562 = vmatpush2.bf16.msra.mxu0 0
    %563 = vmatprep.subr.bf16.mxu0 0
    %564 = vmatpush2.bf16.msra.mxu0 0
    %565 = vmatprep.subr.bf16.mxu0 0
    %566 = vmatpush2.bf16.msra.mxu0 0
    %567 = vmatprep.subr.bf16.mxu0 0
    %568 = vmatpush2.bf16.msra.mxu0 0
    %569 = vmatprep.mubr.bf16.mxu0 0
    %570 = vmatmul.mubr.bf16.gmra.mxu0 %v307
    %v571 = vpop.f32.mrf.mxu0
    %v572 = vadd.f32 0.0, %v571
    %v573 = vpop.f32.mrf.mxu0
    %v574 = vpop.f32.mrf.mxu0
    %v575 = vpop.f32.mrf.mxu0
    %576 = vdwg.mxu0
    %v593 = vunpack.c.l.b16 %v72
    %v594 = vunpack.c.l.b16 %v73
    %v595 = vunpack.c.l.b16 %v74
    %v596 = vunpack.c.l.b16 %v75
    %v597 = vunpack.c.l.b16 %v76
    %v598 = vunpack.c.l.b16 %v77
    %v599 = vunpack.c.l.b16 %v78
    %v600 = vunpack.c.l.b16 %v79
    %v601 = vunpack.c.l.b16 %v80
    %v602 = vunpack.c.l.b16 %v81
    %v603 = vunpack.c.l.b16 %v82
    %v604 = vunpack.c.l.b16 %v83
    %v605 = vunpack.c.l.b16 %v84
    %v606 = vunpack.c.l.b16 %v85
    %v607 = vunpack.c.l.b16 %v86
    %v608 = vunpack.c.l.b16 %v87
    %v609 = vpack.c.b16 %v594, %v593
    %v610 = vpack.c.b16 %v596, %v595
    %v611 = vpack.c.b16 %v598, %v597
    %v612 = vpack.c.b16 %v600, %v599
    %v613 = vpack.c.b16 %v602, %v601
    %v614 = vpack.c.b16 %v604, %v603
    %v615 = vpack.c.b16 %v606, %v605
    %v616 = vpack.c.b16 %v608, %v607
    %625 = vmatprep.subr.bf16.mxu0 0
    %626 = vmatpush1.bf16.msra.mxu0 %v616
    %627 = vmatprep.subr.bf16.mxu0 0
    %628 = vmatpush1.bf16.msra.mxu0 %v615
    %629 = vmatprep.subr.bf16.mxu0 0
    %630 = vmatpush1.bf16.msra.mxu0 %v614
    %631 = vmatprep.subr.bf16.mxu0 0
    %632 = vmatpush1.bf16.msra.mxu0 %v613
    %633 = vmatprep.subr.bf16.mxu0 0
    %634 = vmatpush1.bf16.msra.mxu0 %v612
    %635 = vmatprep.subr.bf16.mxu0 0
    %636 = vmatpush1.bf16.msra.mxu0 %v611
    %637 = vmatprep.subr.bf16.mxu0 0
    %638 = vmatpush1.bf16.msra.mxu0 %v610
    %639 = vmatprep.subr.bf16.mxu0 0
    %640 = vmatpush1.bf16.msra.mxu0 %v609
    %641 = vmatprep.subr.bf16.mxu0 0
    %642 = vmatpush2.bf16.msra.mxu0 0
    %643 = vmatprep.subr.bf16.mxu0 0
    %644 = vmatpush2.bf16.msra.mxu0 0
    %645 = vmatprep.subr.bf16.mxu0 0
    %646 = vmatpush2.bf16.msra.mxu0 0
    %647 = vmatprep.subr.bf16.mxu0 0
    %648 = vmatpush2.bf16.msra.mxu0 0
    %649 = vmatprep.subr.bf16.mxu0 0
    %650 = vmatpush2.bf16.msra.mxu0 0
    %651 = vmatprep.subr.bf16.mxu0 0
    %652 = vmatpush2.bf16.msra.mxu0 0
    %653 = vmatprep.subr.bf16.mxu0 0
    %654 = vmatpush2.bf16.msra.mxu0 0
    %655 = vmatprep.subr.bf16.mxu0 0
    %656 = vmatpush2.bf16.msra.mxu0 0
    %657 = vmatprep.mubr.bf16.mxu0 0
    %658 = vmatmul.mubr.bf16.gmra.mxu0 %v308
    %v659 = vpop.f32.mrf.mxu0
    %v660 = vadd.f32 0.0, %v659
    %v661 = vpop.f32.mrf.mxu0
    %v662 = vpop.f32.mrf.mxu0
    %v663 = vpop.f32.mrf.mxu0
    %664 = vdwg.mxu0
    %v681 = vunpack.c.l.b16 %v88
    %v682 = vunpack.c.l.b16 %v89
    %v683 = vunpack.c.l.b16 %v90
    %v684 = vunpack.c.l.b16 %v91
    %v685 = vunpack.c.l.b16 %v92
    %v686 = vunpack.c.l.b16 %v93
    %v687 = vunpack.c.l.b16 %v94
    %v688 = vunpack.c.l.b16 %v95
    %v689 = vunpack.c.l.b16 %v96
    %v690 = vunpack.c.l.b16 %v97
    %v691 = vunpack.c.l.b16 %v98
    %v692 = vunpack.c.l.b16 %v99
    %v693 = vunpack.c.l.b16 %v100
    %v694 = vunpack.c.l.b16 %v101
    %v695 = vunpack.c.l.b16 %v102
    %v696 = vunpack.c.l.b16 %v103
    %v697 = vpack.c.b16 %v682, %v681
    %v698 = vpack.c.b16 %v684, %v683
    %v699 = vpack.c.b16 %v686, %v685
    %v700 = vpack.c.b16 %v688, %v687
    %v701 = vpack.c.b16 %v690, %v689
    %v702 = vpack.c.b16 %v692, %v691
    %v703 = vpack.c.b16 %v694, %v693
    %v704 = vpack.c.b16 %v696, %v695
    %713 = vmatprep.subr.bf16.mxu0 0
    %714 = vmatpush1.bf16.msra.mxu0 %v704
    %715 = vmatprep.subr.bf16.mxu0 0
    %716 = vmatpush1.bf16.msra.mxu0 %v703
    %717 = vmatprep.subr.bf16.mxu0 0
    %718 = vmatpush1.bf16.msra.mxu0 %v702
    %719 = vmatprep.subr.bf16.mxu0 0
    %720 = vmatpush1.bf16.msra.mxu0 %v701
    %721 = vmatprep.subr.bf16.mxu0 0
    %722 = vmatpush1.bf16.msra.mxu0 %v700
    %723 = vmatprep.subr.bf16.mxu0 0
    %724 = vmatpush1.bf16.msra.mxu0 %v699
    %725 = vmatprep.subr.bf16.mxu0 0
    %726 = vmatpush1.bf16.msra.mxu0 %v698
    %727 = vmatprep.subr.bf16.mxu0 0
    %728 = vmatpush1.bf16.msra.mxu0 %v697
    %729 = vmatprep.subr.bf16.mxu0 0
    %730 = vmatpush2.bf16.msra.mxu0 0
    %731 = vmatprep.subr.bf16.mxu0 0
    %732 = vmatpush2.bf16.msra.mxu0 0
    %733 = vmatprep.subr.bf16.mxu0 0
    %734 = vmatpush2.bf16.msra.mxu0 0
    %735 = vmatprep.subr.bf16.mxu0 0
    %736 = vmatpush2.bf16.msra.mxu0 0
    %737 = vmatprep.subr.bf16.mxu0 0
    %738 = vmatpush2.bf16.msra.mxu0 0
    %739 = vmatprep.subr.bf16.mxu0 0
    %740 = vmatpush2.bf16.msra.mxu0 0
    %741 = vmatprep.subr.bf16.mxu0 0
    %742 = vmatpush2.bf16.msra.mxu0 0
    %743 = vmatprep.subr.bf16.mxu0 0
    %744 = vmatpush2.bf16.msra.mxu0 0
    %745 = vmatprep.mubr.bf16.mxu0 0
    %746 = vmatmul.mubr.bf16.gmra.mxu0 %v309
    %v747 = vpop.f32.mrf.mxu0
    %v748 = vadd.f32 0.0, %v747
    %v749 = vpop.f32.mrf.mxu0
    %v750 = vpop.f32.mrf.mxu0
    %v751 = vpop.f32.mrf.mxu0
    %752 = vdwg.mxu0
    %v769 = vunpack.c.l.b16 %v104
    %v770 = vunpack.c.l.b16 %v105
    %v771 = vunpack.c.l.b16 %v106
    %v772 = vunpack.c.l.b16 %v107
    %v773 = vunpack.c.l.b16 %v108
    %v774 = vunpack.c.l.b16 %v109
    %v775 = vunpack.c.l.b16 %v110
    %v776 = vunpack.c.l.b16 %v111
    %v777 = vunpack.c.l.b16 %v112
    %v778 = vunpack.c.l.b16 %v113
    %v779 = vunpack.c.l.b16 %v114
    %v780 = vunpack.c.l.b16 %v115
    %v781 = vunpack.c.l.b16 %v116
    %v782 = vunpack.c.l.b16 %v117
    %v783 = vunpack.c.l.b16 %v118
    %v784 = vunpack.c.l.b16 %v119
    %v785 = vpack.c.b16 %v770, %v769
    %v786 = vpack.c.b16 %v772, %v771
    %v787 = vpack.c.b16 %v774, %v773
    %v788 = vpack.c.b16 %v776, %v775
    %v789 = vpack.c.b16 %v778, %v777
    %v790 = vpack.c.b16 %v780, %v779
    %v791 = vpack.c.b16 %v782, %v781
    %v792 = vpack.c.b16 %v784, %v783
    %801 = vmatprep.subr.bf16.mxu0 0
    %802 = vmatpush1.bf16.msra.mxu0 %v792
    %803 = vmatprep.subr.bf16.mxu0 0
    %804 = vmatpush1.bf16.msra.mxu0 %v791
    %805 = vmatprep.subr.bf16.mxu0 0
    %806 = vmatpush1.bf16.msra.mxu0 %v790
    %807 = vmatprep.subr.bf16.mxu0 0
    %808 = vmatpush1.bf16.msra.mxu0 %v789
    %809 = vmatprep.subr.bf16.mxu0 0
    %810 = vmatpush1.bf16.msra.mxu0 %v788
    %811 = vmatprep.subr.bf16.mxu0 0
    %812 = vmatpush1.bf16.msra.mxu0 %v787
    %813 = vmatprep.subr.bf16.mxu0 0
    %814 = vmatpush1.bf16.msra.mxu0 %v786
    %815 = vmatprep.subr.bf16.mxu0 0
    %816 = vmatpush1.bf16.msra.mxu0 %v785
    %817 = vmatprep.subr.bf16.mxu0 0
    %818 = vmatpush2.bf16.msra.mxu0 0
    %819 = vmatprep.subr.bf16.mxu0 0
    %820 = vmatpush2.bf16.msra.mxu0 0
    %821 = vmatprep.subr.bf16.mxu0 0
    %822 = vmatpush2.bf16.msra.mxu0 0
    %823 = vmatprep.subr.bf16.mxu0 0
    %824 = vmatpush2.bf16.msra.mxu0 0
    %825 = vmatprep.subr.bf16.mxu0 0
    %826 = vmatpush2.bf16.msra.mxu0 0
    %827 = vmatprep.subr.bf16.mxu0 0
    %828 = vmatpush2.bf16.msra.mxu0 0
    %829 = vmatprep.subr.bf16.mxu0 0
    %830 = vmatpush2.bf16.msra.mxu0 0
    %831 = vmatprep.subr.bf16.mxu0 0
    %832 = vmatpush2.bf16.msra.mxu0 0
    %833 = vmatprep.mubr.bf16.mxu0 0
    %834 = vmatmul.mubr.bf16.gmra.mxu0 %v310
    %v835 = vpop.f32.mrf.mxu0
    %v836 = vadd.f32 0.0, %v835
    %v837 = vpop.f32.mrf.mxu0
    %v838 = vpop.f32.mrf.mxu0
    %v839 = vpop.f32.mrf.mxu0
    %840 = vdwg.mxu0
    %v857 = vunpack.c.l.b16 %v120
    %v858 = vunpack.c.l.b16 %v121
    %v859 = vunpack.c.l.b16 %v122
    %v860 = vunpack.c.l.b16 %v123
    %v861 = vunpack.c.l.b16 %v124
    %v862 = vunpack.c.l.b16 %v125
    %v863 = vunpack.c.l.b16 %v126
    %v864 = vunpack.c.l.b16 %v127
    %v865 = vunpack.c.l.b16 %v128
    %v866 = vunpack.c.l.b16 %v129
    %v867 = vunpack.c.l.b16 %v130
    %v868 = vunpack.c.l.b16 %v131
    %v869 = vunpack.c.l.b16 %v132
    %v870 = vunpack.c.l.b16 %v133
    %v871 = vunpack.c.l.b16 %v134
    %v872 = vunpack.c.l.b16 %v135
    %v873 = vpack.c.b16 %v858, %v857
    %v874 = vpack.c.b16 %v860, %v859
    %v875 = vpack.c.b16 %v862, %v861
    %v876 = vpack.c.b16 %v864, %v863
    %v877 = vpack.c.b16 %v866, %v865
    %v878 = vpack.c.b16 %v868, %v867
    %v879 = vpack.c.b16 %v870, %v869
    %v880 = vpack.c.b16 %v872, %v871
    %889 = vmatprep.subr.bf16.mxu0 0
    %890 = vmatpush1.bf16.msra.mxu0 %v880
    %891 = vmatprep.subr.bf16.mxu0 0
    %892 = vmatpush1.bf16.msra.mxu0 %v879
    %893 = vmatprep.subr.bf16.mxu0 0
    %894 = vmatpush1.bf16.msra.mxu0 %v878
    %895 = vmatprep.subr.bf16.mxu0 0
    %896 = vmatpush1.bf16.msra.mxu0 %v877
    %897 = vmatprep.subr.bf16.mxu0 0
    %898 = vmatpush1.bf16.msra.mxu0 %v876
    %899 = vmatprep.subr.bf16.mxu0 0
    %900 = vmatpush1.bf16.msra.mxu0 %v875
    %901 = vmatprep.subr.bf16.mxu0 0
    %902 = vmatpush1.bf16.msra.mxu0 %v874
    %903 = vmatprep.subr.bf16.mxu0 0
    %904 = vmatpush1.bf16.msra.mxu0 %v873
    %905 = vmatprep.subr.bf16.mxu0 0
    %906 = vmatpush2.bf16.msra.mxu0 0
    %907 = vmatprep.subr.bf16.mxu0 0
    %908 = vmatpush2.bf16.msra.mxu0 0
    %909 = vmatprep.subr.bf16.mxu0 0
    %910 = vmatpush2.bf16.msra.mxu0 0
    %911 = vmatprep.subr.bf16.mxu0 0
    %912 = vmatpush2.bf16.msra.mxu0 0
    %913 = vmatprep.subr.bf16.mxu0 0
    %914 = vmatpush2.bf16.msra.mxu0 0
    %915 = vmatprep.subr.bf16.mxu0 0
    %916 = vmatpush2.bf16.msra.mxu0 0
    %917 = vmatprep.subr.bf16.mxu0 0
    %918 = vmatpush2.bf16.msra.mxu0 0
    %919 = vmatprep.subr.bf16.mxu0 0
    %920 = vmatpush2.bf16.msra.mxu0 0
    %921 = vmatprep.mubr.bf16.mxu0 0
    %922 = vmatmul.mubr.bf16.gmra.mxu0 %v311
    %v923 = vpop.f32.mrf.mxu0
    %v924 = vadd.f32 0.0, %v923
    %v925 = vpop.f32.mrf.mxu0
    %v926 = vpop.f32.mrf.mxu0
    %v927 = vpop.f32.mrf.mxu0
    %928 = vdwg.mxu0
    %v945 = vunpack.c.l.b16 %v136
    %v946 = vunpack.c.l.b16 %v137
    %v947 = vunpack.c.l.b16 %v138
    %v948 = vunpack.c.l.b16 %v139
    %v949 = vunpack.c.l.b16 %v140
    %v950 = vunpack.c.l.b16 %v141
    %v951 = vunpack.c.l.b16 %v142
    %v952 = vunpack.c.l.b16 %v143
    %v953 = vunpack.c.l.b16 %v144
    %v954 = vunpack.c.l.b16 %v145
    %v955 = vunpack.c.l.b16 %v146
    %v956 = vunpack.c.l.b16 %v147
    %v957 = vunpack.c.l.b16 %v148
    %v958 = vunpack.c.l.b16 %v149
    %v959 = vunpack.c.l.b16 %v150
    %v960 = vunpack.c.l.b16 %v151
    %v961 = vpack.c.b16 %v946, %v945
    %v962 = vpack.c.b16 %v948, %v947
    %v963 = vpack.c.b16 %v950, %v949
    %v964 = vpack.c.b16 %v952, %v951
    %v965 = vpack.c.b16 %v954, %v953
    %v966 = vpack.c.b16 %v956, %v955
    %v967 = vpack.c.b16 %v958, %v957
    %v968 = vpack.c.b16 %v960, %v959
    %977 = vmatprep.subr.bf16.mxu0 0
    %978 = vmatpush1.bf16.msra.mxu0 %v968
    %979 = vmatprep.subr.bf16.mxu0 0
    %980 = vmatpush1.bf16.msra.mxu0 %v967
    %981 = vmatprep.subr.bf16.mxu0 0
    %982 = vmatpush1.bf16.msra.mxu0 %v966
    %983 = vmatprep.subr.bf16.mxu0 0
    %984 = vmatpush1.bf16.msra.mxu0 %v965
    %985 = vmatprep.subr.bf16.mxu0 0
    %986 = vmatpush1.bf16.msra.mxu0 %v964
    %987 = vmatprep.subr.bf16.mxu0 0
    %988 = vmatpush1.bf16.msra.mxu0 %v963
    %989 = vmatprep.subr.bf16.mxu0 0
    %990 = vmatpush1.bf16.msra.mxu0 %v962
    %991 = vmatprep.subr.bf16.mxu0 0
    %992 = vmatpush1.bf16.msra.mxu0 %v961
    %993 = vmatprep.subr.bf16.mxu0 0
    %994 = vmatpush2.bf16.msra.mxu0 0
    %995 = vmatprep.subr.bf16.mxu0 0
    %996 = vmatpush2.bf16.msra.mxu0 0
    %997 = vmatprep.subr.bf16.mxu0 0
    %998 = vmatpush2.bf16.msra.mxu0 0
    %999 = vmatprep.subr.bf16.mxu0 0
    %1000 = vmatpush2.bf16.msra.mxu0 0
    %1001 = vmatprep.subr.bf16.mxu0 0
    %1002 = vmatpush2.bf16.msra.mxu0 0
    %1003 = vmatprep.subr.bf16.mxu0 0
    %1004 = vmatpush2.bf16.msra.mxu0 0
    %1005 = vmatprep.subr.bf16.mxu0 0
    %1006 = vmatpush2.bf16.msra.mxu0 0
    %1007 = vmatprep.subr.bf16.mxu0 0
    %1008 = vmatpush2.bf16.msra.mxu0 0
    %1009 = vmatprep.mubr.bf16.mxu0 0
    %1010 = vmatmul.mubr.bf16.gmra.mxu0 %v312
    %v1011 = vpop.f32.mrf.mxu0
    %v1012 = vadd.f32 0.0, %v1011
    %v1013 = vpop.f32.mrf.mxu0
    %v1014 = vpop.f32.mrf.mxu0
    %v1015 = vpop.f32.mrf.mxu0
    %1016 = vdwg.mxu0
    %vm1017 = vcmask 64512
    %1018 = vst.msk [vmem:[#allocation2] sm:$0xff] %vm1017, %v396
    %1019 = vst.msk [vmem:[#allocation2 + $0x18] sm:$0xff] %vm1017, %v484
    %1020 = vst.msk [vmem:[#allocation2 + $0x30] sm:$0xff] %vm1017, %v572
    %1021 = vst.msk [vmem:[#allocation2 + $0x48] sm:$0xff] %vm1017, %v660
    %1022 = vst.msk [vmem:[#allocation2 + $0x60] sm:$0xff] %vm1017, %v748
    %1023 = vst.msk [vmem:[#allocation2 + $0x78] sm:$0xff] %vm1017, %v836
    %1024 = vst.msk [vmem:[#allocation2 + $0x90] sm:$0xff] %vm1017, %v924
    %1025 = vst.msk [vmem:[#allocation2 + $0xa8] sm:$0xff] %vm1017, %v1012
    %s1026 = scalar_lea.vmem %s0, 64
    %v1027 = vld [vmem:[%s1026] sm:$0xf]
    %v1028 = vld [vmem:[%s1026 + $0x4] sm:$0xf]
    %v1029 = vld [vmem:[%s1026 + $0x8] sm:$0xf]
    %v1030 = vld [vmem:[%s1026 + $0xc] sm:$0xf]
    %v1031 = vld [vmem:[%s1026 + $0x10] sm:$0xf]
    %v1032 = vld [vmem:[%s1026 + $0x14] sm:$0xf]
    %v1033 = vld [vmem:[%s1026 + $0x18] sm:$0xf]
    %v1034 = vld [vmem:[%s1026 + $0x1c] sm:$0xf]
    %v1035 = vld [vmem:[%s1026 + $0x20] sm:$0xf]
    %v1036 = vld [vmem:[%s1026 + $0x24] sm:$0xf]
    %v1037 = vld [vmem:[%s1026 + $0x28] sm:$0xf]
    %v1038 = vld [vmem:[%s1026 + $0x2c] sm:$0xf]
    %v1039 = vld [vmem:[%s1026 + $0x30] sm:$0xf]
    %v1040 = vld [vmem:[%s1026 + $0x34] sm:$0xf]
    %v1041 = vld [vmem:[%s1026 + $0x38] sm:$0xf]
    %v1042 = vld [vmem:[%s1026 + $0x3c] sm:$0xf]
    %v1059 = vunpack.c.l.b16 %v1027
    %v1060 = vunpack.c.l.b16 %v1028
    %v1061 = vunpack.c.l.b16 %v1029
    %v1062 = vunpack.c.l.b16 %v1030
    %v1063 = vunpack.c.l.b16 %v1031
    %v1064 = vunpack.c.l.b16 %v1032
    %v1065 = vunpack.c.l.b16 %v1033
    %v1066 = vunpack.c.l.b16 %v1034
    %v1067 = vunpack.c.l.b16 %v1035
    %v1068 = vunpack.c.l.b16 %v1036
    %v1069 = vunpack.c.l.b16 %v1037
    %v1070 = vunpack.c.l.b16 %v1038
    %v1071 = vunpack.c.l.b16 %v1039
    %v1072 = vunpack.c.l.b16 %v1040
    %v1073 = vunpack.c.l.b16 %v1041
    %v1074 = vunpack.c.l.b16 %v1042
    %v1075 = vpack.c.b16 %v1060, %v1059
    %v1076 = vpack.c.b16 %v1062, %v1061
    %v1077 = vpack.c.b16 %v1064, %v1063
    %v1078 = vpack.c.b16 %v1066, %v1065
    %v1079 = vpack.c.b16 %v1068, %v1067
    %v1080 = vpack.c.b16 %v1070, %v1069
    %v1081 = vpack.c.b16 %v1072, %v1071
    %v1082 = vpack.c.b16 %v1074, %v1073
    %1091 = vmatprep.subr.bf16.mxu0 0
    %1092 = vmatpush1.bf16.msra.mxu0 %v1082
    %1093 = vmatprep.subr.bf16.mxu0 0
    %1094 = vmatpush1.bf16.msra.mxu0 %v1081
    %1095 = vmatprep.subr.bf16.mxu0 0
    %1096 = vmatpush1.bf16.msra.mxu0 %v1080
    %1097 = vmatprep.subr.bf16.mxu0 0
    %1098 = vmatpush1.bf16.msra.mxu0 %v1079
    %1099 = vmatprep.subr.bf16.mxu0 0
    %1100 = vmatpush1.bf16.msra.mxu0 %v1078
    %1101 = vmatprep.subr.bf16.mxu0 0
    %1102 = vmatpush1.bf16.msra.mxu0 %v1077
    %1103 = vmatprep.subr.bf16.mxu0 0
    %1104 = vmatpush1.bf16.msra.mxu0 %v1076
    %1105 = vmatprep.subr.bf16.mxu0 0
    %1106 = vmatpush1.bf16.msra.mxu0 %v1075
    %1107 = vmatprep.subr.bf16.mxu0 0
    %1108 = vmatpush2.bf16.msra.mxu0 0
    %1109 = vmatprep.subr.bf16.mxu0 0
    %1110 = vmatpush2.bf16.msra.mxu0 0
    %1111 = vmatprep.subr.bf16.mxu0 0
    %1112 = vmatpush2.bf16.msra.mxu0 0
    %1113 = vmatprep.subr.bf16.mxu0 0
    %1114 = vmatpush2.bf16.msra.mxu0 0
    %1115 = vmatprep.subr.bf16.mxu0 0
    %1116 = vmatpush2.bf16.msra.mxu0 0
    %1117 = vmatprep.subr.bf16.mxu0 0
    %1118 = vmatpush2.bf16.msra.mxu0 0
    %1119 = vmatprep.subr.bf16.mxu0 0
    %1120 = vmatpush2.bf16.msra.mxu0 0
    %1121 = vmatprep.subr.bf16.mxu0 0
    %1122 = vmatpush2.bf16.msra.mxu0 0
    %1123 = vmatprep.mubr.bf16.mxu0 0
    %1124 = vmatmul.mubr.bf16.gmra.mxu0 %v184
    %v1125 = vpop.f32.mrf.mxu0
    %v1126 = vadd.f32 0.0, %v1125
    %v1127 = vpop.f32.mrf.mxu0
    %v1128 = vpop.f32.mrf.mxu0
    %v1129 = vadd.f32 0.0, %v1128
    %v1130 = vpop.f32.mrf.mxu0
    %1131 = vmatprep.mubr.bf16.mxu0 0
    %1132 = vmatmul.mubr.bf16.gmra.mxu0 %v185
    %v1133 = vpop.f32.mrf.mxu0
    %v1134 = vadd.f32 0.0, %v1133
    %v1135 = vpop.f32.mrf.mxu0
    %v1136 = vpop.f32.mrf.mxu0
    %v1137 = vadd.f32 0.0, %v1136
    %v1138 = vpop.f32.mrf.mxu0
    %1139 = vmatprep.mubr.bf16.mxu0 0
    %1140 = vmatmul.mubr.bf16.gmra.mxu0 %v186
    %v1141 = vpop.f32.mrf.mxu0
    %v1142 = vadd.f32 0.0, %v1141
    %v1143 = vpop.f32.mrf.mxu0
    %v1144 = vpop.f32.mrf.mxu0
    %v1145 = vadd.f32 0.0, %v1144
    %v1146 = vpop.f32.mrf.mxu0
    %1147 = vmatprep.mubr.bf16.mxu0 0
    %1148 = vmatmul.mubr.bf16.gmra.mxu0 %v187
    %v1149 = vpop.f32.mrf.mxu0
    %v1150 = vadd.f32 0.0, %v1149
    %v1151 = vpop.f32.mrf.mxu0
    %v1152 = vpop.f32.mrf.mxu0
    %v1153 = vadd.f32 0.0, %v1152
    %v1154 = vpop.f32.mrf.mxu0
    %1155 = vdwg.mxu0
    %v1156 = vpack.c.bf16 %v1126, %v1126
    %v1157 = vpack.c.bf16 %v1129, %v1129
    %v1158 = vpack.c.bf16 %v1134, %v1134
    %v1159 = vpack.c.bf16 %v1137, %v1137
    %v1160 = vpack.c.bf16 %v1142, %v1142
    %v1161 = vpack.c.bf16 %v1145, %v1145
    %v1162 = vpack.c.bf16 %v1150, %v1150
    %v1163 = vpack.c.bf16 %v1153, %v1153
    %1164 = vmatprep.subr.bf16.mxu0 0
    %1165 = vmatpush1.bf16.msra.mxu0 %v352
    %1166 = vmatprep.subr.bf16.mxu0 0
    %1167 = vmatpush1.bf16.msra.mxu0 %v351
    %1168 = vmatprep.subr.bf16.mxu0 0
    %1169 = vmatpush1.bf16.msra.mxu0 %v350
    %1170 = vmatprep.subr.bf16.mxu0 0
    %1171 = vmatpush1.bf16.msra.mxu0 %v349
    %1172 = vmatprep.subr.bf16.mxu0 0
    %1173 = vmatpush1.bf16.msra.mxu0 %v348
    %1174 = vmatprep.subr.bf16.mxu0 0
    %1175 = vmatpush1.bf16.msra.mxu0 %v347
    %1176 = vmatprep.subr.bf16.mxu0 0
    %1177 = vmatpush1.bf16.msra.mxu0 %v346
    %1178 = vmatprep.subr.bf16.mxu0 0
    %1179 = vmatpush1.bf16.msra.mxu0 %v345
    %1180 = vmatprep.subr.bf16.mxu0 0
    %1181 = vmatpush2.bf16.msra.mxu0 0
    %1182 = vmatprep.subr.bf16.mxu0 0
    %1183 = vmatpush2.bf16.msra.mxu0 0
    %1184 = vmatprep.subr.bf16.mxu0 0
    %1185 = vmatpush2.bf16.msra.mxu0 0
    %1186 = vmatprep.subr.bf16.mxu0 0
    %1187 = vmatpush2.bf16.msra.mxu0 0
    %1188 = vmatprep.subr.bf16.mxu0 0
    %1189 = vmatpush2.bf16.msra.mxu0 0
    %1190 = vmatprep.subr.bf16.mxu0 0
    %1191 = vmatpush2.bf16.msra.mxu0 0
    %1192 = vmatprep.subr.bf16.mxu0 0
    %1193 = vmatpush2.bf16.msra.mxu0 0
    %1194 = vmatprep.subr.bf16.mxu0 0
    %1195 = vmatpush2.bf16.msra.mxu0 0
    %1196 = vmatprep.mubr.bf16.mxu0 0
    %1197 = vmatmul.mubr.bf16.gmra.mxu0 %v1156
    %v1198 = vpop.f32.mrf.mxu0
    %v1199 = vadd.f32 0.0, %v1198
    %v1200 = vpop.f32.mrf.mxu0
    %v1201 = vpop.f32.mrf.mxu0
    %v1202 = vpop.f32.mrf.mxu0
    %1203 = vdwg.mxu0
    %1204 = vmatprep.subr.bf16.mxu0 0
    %1205 = vmatpush1.bf16.msra.mxu0 %v440
    %1206 = vmatprep.subr.bf16.mxu0 0
    %1207 = vmatpush1.bf16.msra.mxu0 %v439
    %1208 = vmatprep.subr.bf16.mxu0 0
    %1209 = vmatpush1.bf16.msra.mxu0 %v438
    %1210 = vmatprep.subr.bf16.mxu0 0
    %1211 = vmatpush1.bf16.msra.mxu0 %v437
    %1212 = vmatprep.subr.bf16.mxu0 0
    %1213 = vmatpush1.bf16.msra.mxu0 %v436
    %1214 = vmatprep.subr.bf16.mxu0 0
    %1215 = vmatpush1.bf16.msra.mxu0 %v435
    %1216 = vmatprep.subr.bf16.mxu0 0
    %1217 = vmatpush1.bf16.msra.mxu0 %v434
    %1218 = vmatprep.subr.bf16.mxu0 0
    %1219 = vmatpush1.bf16.msra.mxu0 %v433
    %1220 = vmatprep.subr.bf16.mxu0 0
    %1221 = vmatpush2.bf16.msra.mxu0 0
    %1222 = vmatprep.subr.bf16.mxu0 0
    %1223 = vmatpush2.bf16.msra.mxu0 0
    %1224 = vmatprep.subr.bf16.mxu0 0
    %1225 = vmatpush2.bf16.msra.mxu0 0
    %1226 = vmatprep.subr.bf16.mxu0 0
    %1227 = vmatpush2.bf16.msra.mxu0 0
    %1228 = vmatprep.subr.bf16.mxu0 0
    %1229 = vmatpush2.bf16.msra.mxu0 0
    %1230 = vmatprep.subr.bf16.mxu0 0
    %1231 = vmatpush2.bf16.msra.mxu0 0
    %1232 = vmatprep.subr.bf16.mxu0 0
    %1233 = vmatpush2.bf16.msra.mxu0 0
    %1234 = vmatprep.subr.bf16.mxu0 0
    %1235 = vmatpush2.bf16.msra.mxu0 0
    %1236 = vmatprep.mubr.bf16.mxu0 0
    %1237 = vmatmul.mubr.bf16.gmra.mxu0 %v1157
    %v1238 = vpop.f32.mrf.mxu0
    %v1239 = vadd.f32 0.0, %v1238
    %v1240 = vpop.f32.mrf.mxu0
    %v1241 = vpop.f32.mrf.mxu0
    %v1242 = vpop.f32.mrf.mxu0
    %1243 = vdwg.mxu0
    %1244 = vmatprep.subr.bf16.mxu0 0
    %1245 = vmatpush1.bf16.msra.mxu0 %v528
    %1246 = vmatprep.subr.bf16.mxu0 0
    %1247 = vmatpush1.bf16.msra.mxu0 %v527
    %1248 = vmatprep.subr.bf16.mxu0 0
    %1249 = vmatpush1.bf16.msra.mxu0 %v526
    %1250 = vmatprep.subr.bf16.mxu0 0
    %1251 = vmatpush1.bf16.msra.mxu0 %v525
    %1252 = vmatprep.subr.bf16.mxu0 0
    %1253 = vmatpush1.bf16.msra.mxu0 %v524
    %1254 = vmatprep.subr.bf16.mxu0 0
    %1255 = vmatpush1.bf16.msra.mxu0 %v523
    %1256 = vmatprep.subr.bf16.mxu0 0
    %1257 = vmatpush1.bf16.msra.mxu0 %v522
    %1258 = vmatprep.subr.bf16.mxu0 0
    %1259 = vmatpush1.bf16.msra.mxu0 %v521
    %1260 = vmatprep.subr.bf16.mxu0 0
    %1261 = vmatpush2.bf16.msra.mxu0 0
    %1262 = vmatprep.subr.bf16.mxu0 0
    %1263 = vmatpush2.bf16.msra.mxu0 0
    %1264 = vmatprep.subr.bf16.mxu0 0
    %1265 = vmatpush2.bf16.msra.mxu0 0
    %1266 = vmatprep.subr.bf16.mxu0 0
    %1267 = vmatpush2.bf16.msra.mxu0 0
    %1268 = vmatprep.subr.bf16.mxu0 0
    %1269 = vmatpush2.bf16.msra.mxu0 0
    %1270 = vmatprep.subr.bf16.mxu0 0
    %1271 = vmatpush2.bf16.msra.mxu0 0
    %1272 = vmatprep.subr.bf16.mxu0 0
    %1273 = vmatpush2.bf16.msra.mxu0 0
    %1274 = vmatprep.subr.bf16.mxu0 0
    %1275 = vmatpush2.bf16.msra.mxu0 0
    %1276 = vmatprep.mubr.bf16.mxu0 0
    %1277 = vmatmul.mubr.bf16.gmra.mxu0 %v1158
    %v1278 = vpop.f32.mrf.mxu0
    %v1279 = vadd.f32 0.0, %v1278
    %v1280 = vpop.f32.mrf.mxu0
    %v1281 = vpop.f32.mrf.mxu0
    %v1282 = vpop.f32.mrf.mxu0
    %1283 = vdwg.mxu0
    %1284 = vmatprep.subr.bf16.mxu0 0
    %1285 = vmatpush1.bf16.msra.mxu0 %v616
    %1286 = vmatprep.subr.bf16.mxu0 0
    %1287 = vmatpush1.bf16.msra.mxu0 %v615
    %1288 = vmatprep.subr.bf16.mxu0 0
    %1289 = vmatpush1.bf16.msra.mxu0 %v614
    %1290 = vmatprep.subr.bf16.mxu0 0
    %1291 = vmatpush1.bf16.msra.mxu0 %v613
    %1292 = vmatprep.subr.bf16.mxu0 0
    %1293 = vmatpush1.bf16.msra.mxu0 %v612
    %1294 = vmatprep.subr.bf16.mxu0 0
    %1295 = vmatpush1.bf16.msra.mxu0 %v611
    %1296 = vmatprep.subr.bf16.mxu0 0
    %1297 = vmatpush1.bf16.msra.mxu0 %v610
    %1298 = vmatprep.subr.bf16.mxu0 0
    %1299 = vmatpush1.bf16.msra.mxu0 %v609
    %1300 = vmatprep.subr.bf16.mxu0 0
    %1301 = vmatpush2.bf16.msra.mxu0 0
    %1302 = vmatprep.subr.bf16.mxu0 0
    %1303 = vmatpush2.bf16.msra.mxu0 0
    %1304 = vmatprep.subr.bf16.mxu0 0
    %1305 = vmatpush2.bf16.msra.mxu0 0
    %1306 = vmatprep.subr.bf16.mxu0 0
    %1307 = vmatpush2.bf16.msra.mxu0 0
    %1308 = vmatprep.subr.bf16.mxu0 0
    %1309 = vmatpush2.bf16.msra.mxu0 0
    %1310 = vmatprep.subr.bf16.mxu0 0
    %1311 = vmatpush2.bf16.msra.mxu0 0
    %1312 = vmatprep.subr.bf16.mxu0 0
    %1313 = vmatpush2.bf16.msra.mxu0 0
    %1314 = vmatprep.subr.bf16.mxu0 0
    %1315 = vmatpush2.bf16.msra.mxu0 0
    %1316 = vmatprep.mubr.bf16.mxu0 0
    %1317 = vmatmul.mubr.bf16.gmra.mxu0 %v1159
    %v1318 = vpop.f32.mrf.mxu0
    %v1319 = vadd.f32 0.0, %v1318
    %v1320 = vpop.f32.mrf.mxu0
    %v1321 = vpop.f32.mrf.mxu0
    %v1322 = vpop.f32.mrf.mxu0
    %1323 = vdwg.mxu0
    %1324 = vmatprep.subr.bf16.mxu0 0
    %1325 = vmatpush1.bf16.msra.mxu0 %v704
    %1326 = vmatprep.subr.bf16.mxu0 0
    %1327 = vmatpush1.bf16.msra.mxu0 %v703
    %1328 = vmatprep.subr.bf16.mxu0 0
    %1329 = vmatpush1.bf16.msra.mxu0 %v702
    %1330 = vmatprep.subr.bf16.mxu0 0
    %1331 = vmatpush1.bf16.msra.mxu0 %v701
    %1332 = vmatprep.subr.bf16.mxu0 0
    %1333 = vmatpush1.bf16.msra.mxu0 %v700
    %1334 = vmatprep.subr.bf16.mxu0 0
    %1335 = vmatpush1.bf16.msra.mxu0 %v699
    %1336 = vmatprep.subr.bf16.mxu0 0
    %1337 = vmatpush1.bf16.msra.mxu0 %v698
    %1338 = vmatprep.subr.bf16.mxu0 0
    %1339 = vmatpush1.bf16.msra.mxu0 %v697
    %1340 = vmatprep.subr.bf16.mxu0 0
    %1341 = vmatpush2.bf16.msra.mxu0 0
    %1342 = vmatprep.subr.bf16.mxu0 0
    %1343 = vmatpush2.bf16.msra.mxu0 0
    %1344 = vmatprep.subr.bf16.mxu0 0
    %1345 = vmatpush2.bf16.msra.mxu0 0
    %1346 = vmatprep.subr.bf16.mxu0 0
    %1347 = vmatpush2.bf16.msra.mxu0 0
    %1348 = vmatprep.subr.bf16.mxu0 0
    %1349 = vmatpush2.bf16.msra.mxu0 0
    %1350 = vmatprep.subr.bf16.mxu0 0
    %1351 = vmatpush2.bf16.msra.mxu0 0
    %1352 = vmatprep.subr.bf16.mxu0 0
    %1353 = vmatpush2.bf16.msra.mxu0 0
    %1354 = vmatprep.subr.bf16.mxu0 0
    %1355 = vmatpush2.bf16.msra.mxu0 0
    %1356 = vmatprep.mubr.bf16.mxu0 0
    %1357 = vmatmul.mubr.bf16.gmra.mxu0 %v1160
    %v1358 = vpop.f32.mrf.mxu0
    %v1359 = vadd.f32 0.0, %v1358
    %v1360 = vpop.f32.mrf.mxu0
    %v1361 = vpop.f32.mrf.mxu0
    %v1362 = vpop.f32.mrf.mxu0
    %1363 = vdwg.mxu0
    %1364 = vmatprep.subr.bf16.mxu0 0
    %1365 = vmatpush1.bf16.msra.mxu0 %v792
    %1366 = vmatprep.subr.bf16.mxu0 0
    %1367 = vmatpush1.bf16.msra.mxu0 %v791
    %1368 = vmatprep.subr.bf16.mxu0 0
    %1369 = vmatpush1.bf16.msra.mxu0 %v790
    %1370 = vmatprep.subr.bf16.mxu0 0
    %1371 = vmatpush1.bf16.msra.mxu0 %v789
    %1372 = vmatprep.subr.bf16.mxu0 0
    %1373 = vmatpush1.bf16.msra.mxu0 %v788
    %1374 = vmatprep.subr.bf16.mxu0 0
    %1375 = vmatpush1.bf16.msra.mxu0 %v787
    %1376 = vmatprep.subr.bf16.mxu0 0
    %1377 = vmatpush1.bf16.msra.mxu0 %v786
    %1378 = vmatprep.subr.bf16.mxu0 0
    %1379 = vmatpush1.bf16.msra.mxu0 %v785
    %1380 = vmatprep.subr.bf16.mxu0 0
    %1381 = vmatpush2.bf16.msra.mxu0 0
    %1382 = vmatprep.subr.bf16.mxu0 0
    %1383 = vmatpush2.bf16.msra.mxu0 0
    %1384 = vmatprep.subr.bf16.mxu0 0
    %1385 = vmatpush2.bf16.msra.mxu0 0
    %1386 = vmatprep.subr.bf16.mxu0 0
    %1387 = vmatpush2.bf16.msra.mxu0 0
    %1388 = vmatprep.subr.bf16.mxu0 0
    %1389 = vmatpush2.bf16.msra.mxu0 0
    %1390 = vmatprep.subr.bf16.mxu0 0
    %1391 = vmatpush2.bf16.msra.mxu0 0
    %1392 = vmatprep.subr.bf16.mxu0 0
    %1393 = vmatpush2.bf16.msra.mxu0 0
    %1394 = vmatprep.subr.bf16.mxu0 0
    %1395 = vmatpush2.bf16.msra.mxu0 0
    %1396 = vmatprep.mubr.bf16.mxu0 0
    %1397 = vmatmul.mubr.bf16.gmra.mxu0 %v1161
    %v1398 = vpop.f32.mrf.mxu0
    %v1399 = vadd.f32 0.0, %v1398
    %v1400 = vpop.f32.mrf.mxu0
    %v1401 = vpop.f32.mrf.mxu0
    %v1402 = vpop.f32.mrf.mxu0
    %1403 = vdwg.mxu0
    %1404 = vmatprep.subr.bf16.mxu0 0
    %1405 = vmatpush1.bf16.msra.mxu0 %v880
    %1406 = vmatprep.subr.bf16.mxu0 0
    %1407 = vmatpush1.bf16.msra.mxu0 %v879
    %1408 = vmatprep.subr.bf16.mxu0 0
    %1409 = vmatpush1.bf16.msra.mxu0 %v878
    %1410 = vmatprep.subr.bf16.mxu0 0
    %1411 = vmatpush1.bf16.msra.mxu0 %v877
    %1412 = vmatprep.subr.bf16.mxu0 0
    %1413 = vmatpush1.bf16.msra.mxu0 %v876
    %1414 = vmatprep.subr.bf16.mxu0 0
    %1415 = vmatpush1.bf16.msra.mxu0 %v875
    %1416 = vmatprep.subr.bf16.mxu0 0
    %1417 = vmatpush1.bf16.msra.mxu0 %v874
    %1418 = vmatprep.subr.bf16.mxu0 0
    %1419 = vmatpush1.bf16.msra.mxu0 %v873
    %1420 = vmatprep.subr.bf16.mxu0 0
    %1421 = vmatpush2.bf16.msra.mxu0 0
    %1422 = vmatprep.subr.bf16.mxu0 0
    %1423 = vmatpush2.bf16.msra.mxu0 0
    %1424 = vmatprep.subr.bf16.mxu0 0
    %1425 = vmatpush2.bf16.msra.mxu0 0
    %1426 = vmatprep.subr.bf16.mxu0 0
    %1427 = vmatpush2.bf16.msra.mxu0 0
    %1428 = vmatprep.subr.bf16.mxu0 0
    %1429 = vmatpush2.bf16.msra.mxu0 0
    %1430 = vmatprep.subr.bf16.mxu0 0
    %1431 = vmatpush2.bf16.msra.mxu0 0
    %1432 = vmatprep.subr.bf16.mxu0 0
    %1433 = vmatpush2.bf16.msra.mxu0 0
    %1434 = vmatprep.subr.bf16.mxu0 0
    %1435 = vmatpush2.bf16.msra.mxu0 0
    %1436 = vmatprep.mubr.bf16.mxu0 0
    %1437 = vmatmul.mubr.bf16.gmra.mxu0 %v1162
    %v1438 = vpop.f32.mrf.mxu0
    %v1439 = vadd.f32 0.0, %v1438
    %v1440 = vpop.f32.mrf.mxu0
    %v1441 = vpop.f32.mrf.mxu0
    %v1442 = vpop.f32.mrf.mxu0
    %1443 = vdwg.mxu0
    %1444 = vmatprep.subr.bf16.mxu0 0
    %1445 = vmatpush1.bf16.msra.mxu0 %v968
    %1446 = vmatprep.subr.bf16.mxu0 0
    %1447 = vmatpush1.bf16.msra.mxu0 %v967
    %1448 = vmatprep.subr.bf16.mxu0 0
    %1449 = vmatpush1.bf16.msra.mxu0 %v966
    %1450 = vmatprep.subr.bf16.mxu0 0
    %1451 = vmatpush1.bf16.msra.mxu0 %v965
    %1452 = vmatprep.subr.bf16.mxu0 0
    %1453 = vmatpush1.bf16.msra.mxu0 %v964
    %1454 = vmatprep.subr.bf16.mxu0 0
    %1455 = vmatpush1.bf16.msra.mxu0 %v963
    %1456 = vmatprep.subr.bf16.mxu0 0
    %1457 = vmatpush1.bf16.msra.mxu0 %v962
    %1458 = vmatprep.subr.bf16.mxu0 0
    %1459 = vmatpush1.bf16.msra.mxu0 %v961
    %1460 = vmatprep.subr.bf16.mxu0 0
    %1461 = vmatpush2.bf16.msra.mxu0 0
    %1462 = vmatprep.subr.bf16.mxu0 0
    %1463 = vmatpush2.bf16.msra.mxu0 0
    %1464 = vmatprep.subr.bf16.mxu0 0
    %1465 = vmatpush2.bf16.msra.mxu0 0
    %1466 = vmatprep.subr.bf16.mxu0 0
    %1467 = vmatpush2.bf16.msra.mxu0 0
    %1468 = vmatprep.subr.bf16.mxu0 0
    %1469 = vmatpush2.bf16.msra.mxu0 0
    %1470 = vmatprep.subr.bf16.mxu0 0
    %1471 = vmatpush2.bf16.msra.mxu0 0
    %1472 = vmatprep.subr.bf16.mxu0 0
    %1473 = vmatpush2.bf16.msra.mxu0 0
    %1474 = vmatprep.subr.bf16.mxu0 0
    %1475 = vmatpush2.bf16.msra.mxu0 0
    %1476 = vmatprep.mubr.bf16.mxu0 0
    %1477 = vmatmul.mubr.bf16.gmra.mxu0 %v1163
    %v1478 = vpop.f32.mrf.mxu0
    %v1479 = vadd.f32 0.0, %v1478
    %v1480 = vpop.f32.mrf.mxu0
    %v1481 = vpop.f32.mrf.mxu0
    %v1482 = vpop.f32.mrf.mxu0
    %1483 = vdwg.mxu0
    %s1484 = scalar_lea.vmem [#allocation2], 8
    %1485 = vst.msk [vmem:[%s1484] sm:$0xff] %vm1017, %v1199
    %1486 = vst.msk [vmem:[%s1484 + $0x18] sm:$0xff] %vm1017, %v1239
    %1487 = vst.msk [vmem:[%s1484 + $0x30] sm:$0xff] %vm1017, %v1279
    %1488 = vst.msk [vmem:[%s1484 + $0x48] sm:$0xff] %vm1017, %v1319
    %1489 = vst.msk [vmem:[%s1484 + $0x60] sm:$0xff] %vm1017, %v1359
    %1490 = vst.msk [vmem:[%s1484 + $0x78] sm:$0xff] %vm1017, %v1399
    %1491 = vst.msk [vmem:[%s1484 + $0x90] sm:$0xff] %vm1017, %v1439
    %1492 = vst.msk [vmem:[%s1484 + $0xa8] sm:$0xff] %vm1017, %v1479
    %s1493 = scalar_lea.vmem %s0, 128
    %v1494 = vld [vmem:[%s1493] sm:$0xf]
    %v1495 = vld [vmem:[%s1493 + $0x4] sm:$0xf]
    %v1496 = vld [vmem:[%s1493 + $0x8] sm:$0xf]
    %v1497 = vld [vmem:[%s1493 + $0xc] sm:$0xf]
    %v1498 = vld [vmem:[%s1493 + $0x10] sm:$0xf]
    %v1499 = vld [vmem:[%s1493 + $0x14] sm:$0xf]
    %v1500 = vld [vmem:[%s1493 + $0x18] sm:$0xf]
    %v1501 = vld [vmem:[%s1493 + $0x1c] sm:$0xf]
    %v1502 = vld [vmem:[%s1493 + $0x20] sm:$0xf]
    %v1503 = vld [vmem:[%s1493 + $0x24] sm:$0xf]
    %v1504 = vld [vmem:[%s1493 + $0x28] sm:$0xf]
    %v1505 = vld [vmem:[%s1493 + $0x2c] sm:$0xf]
    %v1506 = vld [vmem:[%s1493 + $0x30] sm:$0xf]
    %v1507 = vld [vmem:[%s1493 + $0x34] sm:$0xf]
    %v1508 = vld [vmem:[%s1493 + $0x38] sm:$0xf]
    %v1509 = vld [vmem:[%s1493 + $0x3c] sm:$0xf]
    %v1526 = vunpack.c.l.b16 %v1494
    %v1527 = vunpack.c.l.b16 %v1495
    %v1528 = vunpack.c.l.b16 %v1496
    %v1529 = vunpack.c.l.b16 %v1497
    %v1530 = vunpack.c.l.b16 %v1498
    %v1531 = vunpack.c.l.b16 %v1499
    %v1532 = vunpack.c.l.b16 %v1500
    %v1533 = vunpack.c.l.b16 %v1501
    %v1534 = vunpack.c.l.b16 %v1502
    %v1535 = vunpack.c.l.b16 %v1503
    %v1536 = vunpack.c.l.b16 %v1504
    %v1537 = vunpack.c.l.b16 %v1505
    %v1538 = vunpack.c.l.b16 %v1506
    %v1539 = vunpack.c.l.b16 %v1507
    %v1540 = vunpack.c.l.b16 %v1508
    %v1541 = vunpack.c.l.b16 %v1509
    %v1542 = vpack.c.b16 %v1527, %v1526
    %v1543 = vpack.c.b16 %v1529, %v1528
    %v1544 = vpack.c.b16 %v1531, %v1530
    %v1545 = vpack.c.b16 %v1533, %v1532
    %v1546 = vpack.c.b16 %v1535, %v1534
    %v1547 = vpack.c.b16 %v1537, %v1536
    %v1548 = vpack.c.b16 %v1539, %v1538
    %v1549 = vpack.c.b16 %v1541, %v1540
    %1558 = vmatprep.subr.bf16.mxu0 0
    %1559 = vmatpush1.bf16.msra.mxu0 %v1549
    %1560 = vmatprep.subr.bf16.mxu0 0
    %1561 = vmatpush1.bf16.msra.mxu0 %v1548
    %1562 = vmatprep.subr.bf16.mxu0 0
    %1563 = vmatpush1.bf16.msra.mxu0 %v1547
    %1564 = vmatprep.subr.bf16.mxu0 0
    %1565 = vmatpush1.bf16.msra.mxu0 %v1546
    %1566 = vmatprep.subr.bf16.mxu0 0
    %1567 = vmatpush1.bf16.msra.mxu0 %v1545
    %1568 = vmatprep.subr.bf16.mxu0 0
    %1569 = vmatpush1.bf16.msra.mxu0 %v1544
    %1570 = vmatprep.subr.bf16.mxu0 0
    %1571 = vmatpush1.bf16.msra.mxu0 %v1543
    %1572 = vmatprep.subr.bf16.mxu0 0
    %1573 = vmatpush1.bf16.msra.mxu0 %v1542
    %1574 = vmatprep.subr.bf16.mxu0 0
    %1575 = vmatpush2.bf16.msra.mxu0 0
    %1576 = vmatprep.subr.bf16.mxu0 0
    %1577 = vmatpush2.bf16.msra.mxu0 0
    %1578 = vmatprep.subr.bf16.mxu0 0
    %1579 = vmatpush2.bf16.msra.mxu0 0
    %1580 = vmatprep.subr.bf16.mxu0 0
    %1581 = vmatpush2.bf16.msra.mxu0 0
    %1582 = vmatprep.subr.bf16.mxu0 0
    %1583 = vmatpush2.bf16.msra.mxu0 0
    %1584 = vmatprep.subr.bf16.mxu0 0
    %1585 = vmatpush2.bf16.msra.mxu0 0
    %1586 = vmatprep.subr.bf16.mxu0 0
    %1587 = vmatpush2.bf16.msra.mxu0 0
    %1588 = vmatprep.subr.bf16.mxu0 0
    %1589 = vmatpush2.bf16.msra.mxu0 0
    %1590 = vmatprep.mubr.bf16.mxu0 0
    %1591 = vmatmul.mubr.bf16.gmra.mxu0 %v184
    %v1592 = vpop.f32.mrf.mxu0
    %v1593 = vadd.f32 0.0, %v1592
    %v1594 = vpop.f32.mrf.mxu0
    %v1595 = vpop.f32.mrf.mxu0
    %v1596 = vadd.f32 0.0, %v1595
    %v1597 = vpop.f32.mrf.mxu0
    %1598 = vmatprep.mubr.bf16.mxu0 0
    %1599 = vmatmul.mubr.bf16.gmra.mxu0 %v185
    %v1600 = vpop.f32.mrf.mxu0
    %v1601 = vadd.f32 0.0, %v1600
    %v1602 = vpop.f32.mrf.mxu0
    %v1603 = vpop.f32.mrf.mxu0
    %v1604 = vadd.f32 0.0, %v1603
    %v1605 = vpop.f32.mrf.mxu0
    %1606 = vmatprep.mubr.bf16.mxu0 0
    %1607 = vmatmul.mubr.bf16.gmra.mxu0 %v186
    %v1608 = vpop.f32.mrf.mxu0
    %v1609 = vadd.f32 0.0, %v1608
    %v1610 = vpop.f32.mrf.mxu0
    %v1611 = vpop.f32.mrf.mxu0
    %v1612 = vadd.f32 0.0, %v1611
    %v1613 = vpop.f32.mrf.mxu0
    %1614 = vmatprep.mubr.bf16.mxu0 0
    %1615 = vmatmul.mubr.bf16.gmra.mxu0 %v187
    %v1616 = vpop.f32.mrf.mxu0
    %v1617 = vadd.f32 0.0, %v1616
    %v1618 = vpop.f32.mrf.mxu0
    %v1619 = vpop.f32.mrf.mxu0
    %v1620 = vadd.f32 0.0, %v1619
    %v1621 = vpop.f32.mrf.mxu0
    %1622 = vdwg.mxu0
    %v1623 = vpack.c.bf16 %v1593, %v1593
    %v1624 = vpack.c.bf16 %v1596, %v1596
    %v1625 = vpack.c.bf16 %v1601, %v1601
    %v1626 = vpack.c.bf16 %v1604, %v1604
    %v1627 = vpack.c.bf16 %v1609, %v1609
    %v1628 = vpack.c.bf16 %v1612, %v1612
    %v1629 = vpack.c.bf16 %v1617, %v1617
    %v1630 = vpack.c.bf16 %v1620, %v1620
    %1631 = vmatprep.subr.bf16.mxu0 0
    %1632 = vmatpush1.bf16.msra.mxu0 %v352
    %1633 = vmatprep.subr.bf16.mxu0 0
    %1634 = vmatpush1.bf16.msra.mxu0 %v351
    %1635 = vmatprep.subr.bf16.mxu0 0
    %1636 = vmatpush1.bf16.msra.mxu0 %v350
    %1637 = vmatprep.subr.bf16.mxu0 0
    %1638 = vmatpush1.bf16.msra.mxu0 %v349
    %1639 = vmatprep.subr.bf16.mxu0 0
    %1640 = vmatpush1.bf16.msra.mxu0 %v348
    %1641 = vmatprep.subr.bf16.mxu0 0
    %1642 = vmatpush1.bf16.msra.mxu0 %v347
    %1643 = vmatprep.subr.bf16.mxu0 0
    %1644 = vmatpush1.bf16.msra.mxu0 %v346
    %1645 = vmatprep.subr.bf16.mxu0 0
    %1646 = vmatpush1.bf16.msra.mxu0 %v345
    %1647 = vmatprep.subr.bf16.mxu0 0
    %1648 = vmatpush2.bf16.msra.mxu0 0
    %1649 = vmatprep.subr.bf16.mxu0 0
    %1650 = vmatpush2.bf16.msra.mxu0 0
    %1651 = vmatprep.subr.bf16.mxu0 0
    %1652 = vmatpush2.bf16.msra.mxu0 0
    %1653 = vmatprep.subr.bf16.mxu0 0
    %1654 = vmatpush2.bf16.msra.mxu0 0
    %1655 = vmatprep.subr.bf16.mxu0 0
    %1656 = vmatpush2.bf16.msra.mxu0 0
    %1657 = vmatprep.subr.bf16.mxu0 0
    %1658 = vmatpush2.bf16.msra.mxu0 0
    %1659 = vmatprep.subr.bf16.mxu0 0
    %1660 = vmatpush2.bf16.msra.mxu0 0
    %1661 = vmatprep.subr.bf16.mxu0 0
    %1662 = vmatpush2.bf16.msra.mxu0 0
    %1663 = vmatprep.mubr.bf16.mxu0 0
    %1664 = vmatmul.mubr.bf16.gmra.mxu0 %v1623
    %v1665 = vpop.f32.mrf.mxu0
    %v1666 = vadd.f32 0.0, %v1665
    %v1667 = vpop.f32.mrf.mxu0
    %v1668 = vpop.f32.mrf.mxu0
    %v1669 = vpop.f32.mrf.mxu0
    %1670 = vdwg.mxu0
    %1671 = vmatprep.subr.bf16.mxu0 0
    %1672 = vmatpush1.bf16.msra.mxu0 %v440
    %1673 = vmatprep.subr.bf16.mxu0 0
    %1674 = vmatpush1.bf16.msra.mxu0 %v439
    %1675 = vmatprep.subr.bf16.mxu0 0
    %1676 = vmatpush1.bf16.msra.mxu0 %v438
    %1677 = vmatprep.subr.bf16.mxu0 0
    %1678 = vmatpush1.bf16.msra.mxu0 %v437
    %1679 = vmatprep.subr.bf16.mxu0 0
    %1680 = vmatpush1.bf16.msra.mxu0 %v436
    %1681 = vmatprep.subr.bf16.mxu0 0
    %1682 = vmatpush1.bf16.msra.mxu0 %v435
    %1683 = vmatprep.subr.bf16.mxu0 0
    %1684 = vmatpush1.bf16.msra.mxu0 %v434
    %1685 = vmatprep.subr.bf16.mxu0 0
    %1686 = vmatpush1.bf16.msra.mxu0 %v433
    %1687 = vmatprep.subr.bf16.mxu0 0
    %1688 = vmatpush2.bf16.msra.mxu0 0
    %1689 = vmatprep.subr.bf16.mxu0 0
    %1690 = vmatpush2.bf16.msra.mxu0 0
    %1691 = vmatprep.subr.bf16.mxu0 0
    %1692 = vmatpush2.bf16.msra.mxu0 0
    %1693 = vmatprep.subr.bf16.mxu0 0
    %1694 = vmatpush2.bf16.msra.mxu0 0
    %1695 = vmatprep.subr.bf16.mxu0 0
    %1696 = vmatpush2.bf16.msra.mxu0 0
    %1697 = vmatprep.subr.bf16.mxu0 0
    %1698 = vmatpush2.bf16.msra.mxu0 0
    %1699 = vmatprep.subr.bf16.mxu0 0
    %1700 = vmatpush2.bf16.msra.mxu0 0
    %1701 = vmatprep.subr.bf16.mxu0 0
    %1702 = vmatpush2.bf16.msra.mxu0 0
    %1703 = vmatprep.mubr.bf16.mxu0 0
    %1704 = vmatmul.mubr.bf16.gmra.mxu0 %v1624
    %v1705 = vpop.f32.mrf.mxu0
    %v1706 = vadd.f32 0.0, %v1705
    %v1707 = vpop.f32.mrf.mxu0
    %v1708 = vpop.f32.mrf.mxu0
    %v1709 = vpop.f32.mrf.mxu0
    %1710 = vdwg.mxu0
    %1711 = vmatprep.subr.bf16.mxu0 0
    %1712 = vmatpush1.bf16.msra.mxu0 %v528
    %1713 = vmatprep.subr.bf16.mxu0 0
    %1714 = vmatpush1.bf16.msra.mxu0 %v527
    %1715 = vmatprep.subr.bf16.mxu0 0
    %1716 = vmatpush1.bf16.msra.mxu0 %v526
    %1717 = vmatprep.subr.bf16.mxu0 0
    %1718 = vmatpush1.bf16.msra.mxu0 %v525
    %1719 = vmatprep.subr.bf16.mxu0 0
    %1720 = vmatpush1.bf16.msra.mxu0 %v524
    %1721 = vmatprep.subr.bf16.mxu0 0
    %1722 = vmatpush1.bf16.msra.mxu0 %v523
    %1723 = vmatprep.subr.bf16.mxu0 0
    %1724 = vmatpush1.bf16.msra.mxu0 %v522
    %1725 = vmatprep.subr.bf16.mxu0 0
    %1726 = vmatpush1.bf16.msra.mxu0 %v521
    %1727 = vmatprep.subr.bf16.mxu0 0
    %1728 = vmatpush2.bf16.msra.mxu0 0
    %1729 = vmatprep.subr.bf16.mxu0 0
    %1730 = vmatpush2.bf16.msra.mxu0 0
    %1731 = vmatprep.subr.bf16.mxu0 0
    %1732 = vmatpush2.bf16.msra.mxu0 0
    %1733 = vmatprep.subr.bf16.mxu0 0
    %1734 = vmatpush2.bf16.msra.mxu0 0
    %1735 = vmatprep.subr.bf16.mxu0 0
    %1736 = vmatpush2.bf16.msra.mxu0 0
    %1737 = vmatprep.subr.bf16.mxu0 0
    %1738 = vmatpush2.bf16.msra.mxu0 0
    %1739 = vmatprep.subr.bf16.mxu0 0
    %1740 = vmatpush2.bf16.msra.mxu0 0
    %1741 = vmatprep.subr.bf16.mxu0 0
    %1742 = vmatpush2.bf16.msra.mxu0 0
    %1743 = vmatprep.mubr.bf16.mxu0 0
    %1744 = vmatmul.mubr.bf16.gmra.mxu0 %v1625
    %v1745 = vpop.f32.mrf.mxu0
    %v1746 = vadd.f32 0.0, %v1745
    %v1747 = vpop.f32.mrf.mxu0
    %v1748 = vpop.f32.mrf.mxu0
    %v1749 = vpop.f32.mrf.mxu0
    %1750 = vdwg.mxu0
    %1751 = vmatprep.subr.bf16.mxu0 0
    %1752 = vmatpush1.bf16.msra.mxu0 %v616
    %1753 = vmatprep.subr.bf16.mxu0 0
    %1754 = vmatpush1.bf16.msra.mxu0 %v615
    %1755 = vmatprep.subr.bf16.mxu0 0
    %1756 = vmatpush1.bf16.msra.mxu0 %v614
    %1757 = vmatprep.subr.bf16.mxu0 0
    %1758 = vmatpush1.bf16.msra.mxu0 %v613
    %1759 = vmatprep.subr.bf16.mxu0 0
    %1760 = vmatpush1.bf16.msra.mxu0 %v612
    %1761 = vmatprep.subr.bf16.mxu0 0
    %1762 = vmatpush1.bf16.msra.mxu0 %v611
    %1763 = vmatprep.subr.bf16.mxu0 0
    %1764 = vmatpush1.bf16.msra.mxu0 %v610
    %1765 = vmatprep.subr.bf16.mxu0 0
    %1766 = vmatpush1.bf16.msra.mxu0 %v609
    %1767 = vmatprep.subr.bf16.mxu0 0
    %1768 = vmatpush2.bf16.msra.mxu0 0
    %1769 = vmatprep.subr.bf16.mxu0 0
    %1770 = vmatpush2.bf16.msra.mxu0 0
    %1771 = vmatprep.subr.bf16.mxu0 0
    %1772 = vmatpush2.bf16.msra.mxu0 0
    %1773 = vmatprep.subr.bf16.mxu0 0
    %1774 = vmatpush2.bf16.msra.mxu0 0
    %1775 = vmatprep.subr.bf16.mxu0 0
    %1776 = vmatpush2.bf16.msra.mxu0 0
    %1777 = vmatprep.subr.bf16.mxu0 0
    %1778 = vmatpush2.bf16.msra.mxu0 0
    %1779 = vmatprep.subr.bf16.mxu0 0
    %1780 = vmatpush2.bf16.msra.mxu0 0
    %1781 = vmatprep.subr.bf16.mxu0 0
    %1782 = vmatpush2.bf16.msra.mxu0 0
    %1783 = vmatprep.mubr.bf16.mxu0 0
    %1784 = vmatmul.mubr.bf16.gmra.mxu0 %v1626
    %v1785 = vpop.f32.mrf.mxu0
    %v1786 = vadd.f32 0.0, %v1785
    %v1787 = vpop.f32.mrf.mxu0
    %v1788 = vpop.f32.mrf.mxu0
    %v1789 = vpop.f32.mrf.mxu0
    %1790 = vdwg.mxu0
    %1791 = vmatprep.subr.bf16.mxu0 0
    %1792 = vmatpush1.bf16.msra.mxu0 %v704
    %1793 = vmatprep.subr.bf16.mxu0 0
    %1794 = vmatpush1.bf16.msra.mxu0 %v703
    %1795 = vmatprep.subr.bf16.mxu0 0
    %1796 = vmatpush1.bf16.msra.mxu0 %v702
    %1797 = vmatprep.subr.bf16.mxu0 0
    %1798 = vmatpush1.bf16.msra.mxu0 %v701
    %1799 = vmatprep.subr.bf16.mxu0 0
    %1800 = vmatpush1.bf16.msra.mxu0 %v700
    %1801 = vmatprep.subr.bf16.mxu0 0
    %1802 = vmatpush1.bf16.msra.mxu0 %v699
    %1803 = vmatprep.subr.bf16.mxu0 0
    %1804 = vmatpush1.bf16.msra.mxu0 %v698
    %1805 = vmatprep.subr.bf16.mxu0 0
    %1806 = vmatpush1.bf16.msra.mxu0 %v697
    %1807 = vmatprep.subr.bf16.mxu0 0
    %1808 = vmatpush2.bf16.msra.mxu0 0
    %1809 = vmatprep.subr.bf16.mxu0 0
    %1810 = vmatpush2.bf16.msra.mxu0 0
    %1811 = vmatprep.subr.bf16.mxu0 0
    %1812 = vmatpush2.bf16.msra.mxu0 0
    %1813 = vmatprep.subr.bf16.mxu0 0
    %1814 = vmatpush2.bf16.msra.mxu0 0
    %1815 = vmatprep.subr.bf16.mxu0 0
    %1816 = vmatpush2.bf16.msra.mxu0 0
    %1817 = vmatprep.subr.bf16.mxu0 0
    %1818 = vmatpush2.bf16.msra.mxu0 0
    %1819 = vmatprep.subr.bf16.mxu0 0
    %1820 = vmatpush2.bf16.msra.mxu0 0
    %1821 = vmatprep.subr.bf16.mxu0 0
    %1822 = vmatpush2.bf16.msra.mxu0 0
    %1823 = vmatprep.mubr.bf16.mxu0 0
    %1824 = vmatmul.mubr.bf16.gmra.mxu0 %v1627
    %v1825 = vpop.f32.mrf.mxu0
    %v1826 = vadd.f32 0.0, %v1825
    %v1827 = vpop.f32.mrf.mxu0
    %v1828 = vpop.f32.mrf.mxu0
    %v1829 = vpop.f32.mrf.mxu0
    %1830 = vdwg.mxu0
    %1831 = vmatprep.subr.bf16.mxu0 0
    %1832 = vmatpush1.bf16.msra.mxu0 %v792
    %1833 = vmatprep.subr.bf16.mxu0 0
    %1834 = vmatpush1.bf16.msra.mxu0 %v791
    %1835 = vmatprep.subr.bf16.mxu0 0
    %1836 = vmatpush1.bf16.msra.mxu0 %v790
    %1837 = vmatprep.subr.bf16.mxu0 0
    %1838 = vmatpush1.bf16.msra.mxu0 %v789
    %1839 = vmatprep.subr.bf16.mxu0 0
    %1840 = vmatpush1.bf16.msra.mxu0 %v788
    %1841 = vmatprep.subr.bf16.mxu0 0
    %1842 = vmatpush1.bf16.msra.mxu0 %v787
    %1843 = vmatprep.subr.bf16.mxu0 0
    %1844 = vmatpush1.bf16.msra.mxu0 %v786
    %1845 = vmatprep.subr.bf16.mxu0 0
    %1846 = vmatpush1.bf16.msra.mxu0 %v785
    %1847 = vmatprep.subr.bf16.mxu0 0
    %1848 = vmatpush2.bf16.msra.mxu0 0
    %1849 = vmatprep.subr.bf16.mxu0 0
    %1850 = vmatpush2.bf16.msra.mxu0 0
    %1851 = vmatprep.subr.bf16.mxu0 0
    %1852 = vmatpush2.bf16.msra.mxu0 0
    %1853 = vmatprep.subr.bf16.mxu0 0
    %1854 = vmatpush2.bf16.msra.mxu0 0
    %1855 = vmatprep.subr.bf16.mxu0 0
    %1856 = vmatpush2.bf16.msra.mxu0 0
    %1857 = vmatprep.subr.bf16.mxu0 0
    %1858 = vmatpush2.bf16.msra.mxu0 0
    %1859 = vmatprep.subr.bf16.mxu0 0
    %1860 = vmatpush2.bf16.msra.mxu0 0
    %1861 = vmatprep.subr.bf16.mxu0 0
    %1862 = vmatpush2.bf16.msra.mxu0 0
    %1863 = vmatprep.mubr.bf16.mxu0 0
    %1864 = vmatmul.mubr.bf16.gmra.mxu0 %v1628
    %v1865 = vpop.f32.mrf.mxu0
    %v1866 = vadd.f32 0.0, %v1865
    %v1867 = vpop.f32.mrf.mxu0
    %v1868 = vpop.f32.mrf.mxu0
    %v1869 = vpop.f32.mrf.mxu0
    %1870 = vdwg.mxu0
    %1871 = vmatprep.subr.bf16.mxu0 0
    %1872 = vmatpush1.bf16.msra.mxu0 %v880
    %1873 = vmatprep.subr.bf16.mxu0 0
    %1874 = vmatpush1.bf16.msra.mxu0 %v879
    %1875 = vmatprep.subr.bf16.mxu0 0
    %1876 = vmatpush1.bf16.msra.mxu0 %v878
    %1877 = vmatprep.subr.bf16.mxu0 0
    %1878 = vmatpush1.bf16.msra.mxu0 %v877
    %1879 = vmatprep.subr.bf16.mxu0 0
    %1880 = vmatpush1.bf16.msra.mxu0 %v876
    %1881 = vmatprep.subr.bf16.mxu0 0
    %1882 = vmatpush1.bf16.msra.mxu0 %v875
    %1883 = vmatprep.subr.bf16.mxu0 0
    %1884 = vmatpush1.bf16.msra.mxu0 %v874
    %1885 = vmatprep.subr.bf16.mxu0 0
    %1886 = vmatpush1.bf16.msra.mxu0 %v873
    %1887 = vmatprep.subr.bf16.mxu0 0
    %1888 = vmatpush2.bf16.msra.mxu0 0
    %1889 = vmatprep.subr.bf16.mxu0 0
    %1890 = vmatpush2.bf16.msra.mxu0 0
    %1891 = vmatprep.subr.bf16.mxu0 0
    %1892 = vmatpush2.bf16.msra.mxu0 0
    %1893 = vmatprep.subr.bf16.mxu0 0
    %1894 = vmatpush2.bf16.msra.mxu0 0
    %1895 = vmatprep.subr.bf16.mxu0 0
    %1896 = vmatpush2.bf16.msra.mxu0 0
    %1897 = vmatprep.subr.bf16.mxu0 0
    %1898 = vmatpush2.bf16.msra.mxu0 0
    %1899 = vmatprep.subr.bf16.mxu0 0
    %1900 = vmatpush2.bf16.msra.mxu0 0
    %1901 = vmatprep.subr.bf16.mxu0 0
    %1902 = vmatpush2.bf16.msra.mxu0 0
    %1903 = vmatprep.mubr.bf16.mxu0 0
    %1904 = vmatmul.mubr.bf16.gmra.mxu0 %v1629
    %v1905 = vpop.f32.mrf.mxu0
    %v1906 = vadd.f32 0.0, %v1905
    %v1907 = vpop.f32.mrf.mxu0
    %v1908 = vpop.f32.mrf.mxu0
    %v1909 = vpop.f32.mrf.mxu0
    %1910 = vdwg.mxu0
    %1911 = vmatprep.subr.bf16.mxu0 0
    %1912 = vmatpush1.bf16.msra.mxu0 %v968
    %1913 = vmatprep.subr.bf16.mxu0 0
    %1914 = vmatpush1.bf16.msra.mxu0 %v967
    %1915 = vmatprep.subr.bf16.mxu0 0
    %1916 = vmatpush1.bf16.msra.mxu0 %v966
    %1917 = vmatprep.subr.bf16.mxu0 0
    %1918 = vmatpush1.bf16.msra.mxu0 %v965
    %1919 = vmatprep.subr.bf16.mxu0 0
    %1920 = vmatpush1.bf16.msra.mxu0 %v964
    %1921 = vmatprep.subr.bf16.mxu0 0
    %1922 = vmatpush1.bf16.msra.mxu0 %v963
    %1923 = vmatprep.subr.bf16.mxu0 0
    %1924 = vmatpush1.bf16.msra.mxu0 %v962
    %1925 = vmatprep.subr.bf16.mxu0 0
    %1926 = vmatpush1.bf16.msra.mxu0 %v961
    %1927 = vmatprep.subr.bf16.mxu0 0
    %1928 = vmatpush2.bf16.msra.mxu0 0
    %1929 = vmatprep.subr.bf16.mxu0 0
    %1930 = vmatpush2.bf16.msra.mxu0 0
    %1931 = vmatprep.subr.bf16.mxu0 0
    %1932 = vmatpush2.bf16.msra.mxu0 0
    %1933 = vmatprep.subr.bf16.mxu0 0
    %1934 = vmatpush2.bf16.msra.mxu0 0
    %1935 = vmatprep.subr.bf16.mxu0 0
    %1936 = vmatpush2.bf16.msra.mxu0 0
    %1937 = vmatprep.subr.bf16.mxu0 0
    %1938 = vmatpush2.bf16.msra.mxu0 0
    %1939 = vmatprep.subr.bf16.mxu0 0
    %1940 = vmatpush2.bf16.msra.mxu0 0
    %1941 = vmatprep.subr.bf16.mxu0 0
    %1942 = vmatpush2.bf16.msra.mxu0 0
    %1943 = vmatprep.mubr.bf16.mxu0 0
    %1944 = vmatmul.mubr.bf16.gmra.mxu0 %v1630
    %v1945 = vpop.f32.mrf.mxu0
    %v1946 = vadd.f32 0.0, %v1945
    %v1947 = vpop.f32.mrf.mxu0
    %v1948 = vpop.f32.mrf.mxu0
    %v1949 = vpop.f32.mrf.mxu0
    %1950 = vdwg.mxu0
    %s1951 = scalar_lea.vmem [#allocation2], 16
    %1952 = vst.msk [vmem:[%s1951] sm:$0xff] %vm1017, %v1666
    %1953 = vst.msk [vmem:[%s1951 + $0x18] sm:$0xff] %vm1017, %v1706
    %1954 = vst.msk [vmem:[%s1951 + $0x30] sm:$0xff] %vm1017, %v1746
    %1955 = vst.msk [vmem:[%s1951 + $0x48] sm:$0xff] %vm1017, %v1786
    %1956 = vst.msk [vmem:[%s1951 + $0x60] sm:$0xff] %vm1017, %v1826
    %1957 = vst.msk [vmem:[%s1951 + $0x78] sm:$0xff] %vm1017, %v1866
    %1958 = vst.msk [vmem:[%s1951 + $0x90] sm:$0xff] %vm1017, %v1906
    %1959 = vst.msk [vmem:[%s1951 + $0xa8] sm:$0xff] %vm1017, %v1946
    // Predicated region
    $region14: #{tpu_custom_call.1} parent=1 // pred_check
      _
    $region15: #{tpu_custom_call.1} parent=1 // pred_check_branch
      %1961 = sbr.rel (0) target = $region17
    $region16: #{tpu_custom_call.1} parent=1 // pred_region
      %s1963 = ssub.s32 3072, 3072
      %1964 = vsyncadd [#allocation3], %s1963
      %s1965 = sshll.u32 [#allocation2], 4
      %s1966 = int_to_ptr.vmem [resolvable:$true] %s1965
      %1971 = dma.vmem_to_hbm [thread:$0]  %s1966, 3072, %s3, [#allocation3], 128, 128, 8
    $region17: #{tpu_custom_call.1} parent=1 // pred_fallthru
      _
    // Predicated region
    $region18: #{tpu_custom_call.1} parent=1 // pred_check
      _
    $region19: #{tpu_custom_call.1} parent=1 // pred_check_branch
      %1973 = sbr.rel (0) target = $region21
    $region20: #{tpu_custom_call.1} parent=1 // pred_region
      %1974 = dma.done [#allocation3], 3072
    $region21: #{tpu_custom_call.1} parent=1 // pred_fallthru
      _
    %1975 = vsyncpa [#allocation3], 1

</llo_original>
